<compile_context>
chip_gen: v6e
topology: v6e:2x2x1
jax: 0.10.0
libtpu: 0.0.40
codegen_flags: <defaults>
</compile_context>

<pallas_src>
import functools
import math

import jax
import jax.numpy as jnp
from jax.experimental import pallas as pl
from jax.experimental.pallas import tpu as pltpu

EPS = 1e-6
NEG_INF = -1e9


# ---------------------------------------------------------------------------
# Fused encoder-layer kernel: one (batch, query-block) tile per grid step.
# ---------------------------------------------------------------------------
def _encoder_layer_kernel(heads,
                          xq_ref, xf_ref, mask_ref,
                          ln1a_ref, ln1b_ref,
                          wq_ref, bq_ref, wk_ref, bk_ref, wv_ref, bv_ref,
                          wo_ref, bo_ref,
                          ln2a_ref, ln2b_ref,
                          w1_ref, b1_ref, w2_ref, b2_ref,
                          o_ref):
    f32, bf16 = jnp.float32, jnp.bfloat16
    _, TQ, D = xq_ref.shape
    L = xf_ref.shape[1]
    dk = D // heads

    xq = xq_ref[0].astype(f32)            # (TQ, D)  query rows of this block
    xf = xf_ref[0].astype(f32)            # (L, D)   full sequence (for K / V)

    def norm(v, a_ref, b_ref):
        # Norm(v) = alpha * (v - mean) / (std_unbiased + eps) + bias   (torch .std())
        n = v.shape[-1]
        mean = jnp.mean(v, axis=-1, keepdims=True)
        c = v - mean
        var = jnp.sum(c * c, axis=-1, keepdims=True) * (1.0 / (n - 1))
        return a_ref[...] * c / (jnp.sqrt(var) + EPS) + b_ref[...]

    # ----------------- sublayer 1: self-attention on norm_1(x) -------------
    x2q = norm(xq, ln1a_ref, ln1b_ref).astype(bf16)       # (TQ, D)
    x2f = norm(xf, ln1a_ref, ln1b_ref).astype(bf16)       # (L, D)

    # Full-width projections (1/sqrt(dk) folded into Wq/bq in the wrapper).
    q = (jnp.dot(x2q, wq_ref[...], preferred_element_type=f32)
         + bq_ref[...]).astype(bf16)                       # (TQ, D)
    k = (jnp.dot(x2f, wk_ref[...], preferred_element_type=f32)
         + bk_ref[...]).astype(bf16)                       # (L, D)
    v = (jnp.dot(x2f, wv_ref[...], preferred_element_type=f32)
         + bv_ref[...]).astype(bf16)                       # (L, D)

    masked = mask_ref[0] == 0.0                            # (1, L), hoisted

    # Heads: static unroll of independent 2-D chains (no 3-D relayouts).
    heads_out = []
    for h in range(heads):
        sl = slice(h * dk, (h + 1) * dk)
        s = jnp.einsum('qc,kc->qk', q[:, sl], k[:, sl],
                       preferred_element_type=f32)          # (TQ, L)
        s = jnp.where(masked, jnp.float32(NEG_INF), s)      # masked_fill(mask==0, -1e9)
        m = jnp.max(s, axis=-1, keepdims=True)
        e = jnp.exp(s - m)
        p = (e * pl.reciprocal(jnp.sum(e, axis=-1, keepdims=True),
                               approx=True)).astype(bf16)
        heads_out.append(jnp.dot(p, v[:, sl],
                                 preferred_element_type=f32).astype(bf16))  # (TQ, dk)

    # Output projection: concat heads -> one full-width matmul against Wo.
    concat = jnp.concatenate(heads_out, axis=-1)            # (TQ, H*dk) bf16
    attn = jnp.dot(concat, wo_ref[...],
                   preferred_element_type=f32) + bo_ref[...]  # (TQ, D)

    # Reference literally does: x = attn(x2, x2, x2, mask); x = x + dropout_1(x)
    # -> residual to the attention output (eval dropout = identity) = 2 * attn.
    x = attn + attn

    # ----------------- sublayer 2: feed-forward on norm_2(x) ---------------
    x2 = norm(x, ln2a_ref, ln2b_ref).astype(bf16)
    hid = jnp.dot(x2, w1_ref[...], preferred_element_type=f32) + b1_ref[...]
    hid = jnp.maximum(hid, 0.0).astype(bf16)                # ReLU fused with cast
    y = jnp.dot(hid, w2_ref[...], preferred_element_type=f32) + b2_ref[...]

    # x = x + dropout_2(ff(x2))   (eval: identity)
    o_ref[0] = (x + y).astype(o_ref.dtype)


# ---------------------------------------------------------------------------
# Wrapper: weight repacking + pallas_call
# ---------------------------------------------------------------------------
def encoder_layer(x, src_mask, params, heads, tq=None):
    B, L, D = x.shape
    H = heads
    assert D % H == 0, "d_model must be divisible by heads"
    dk = D // H
    F = params["b1"].shape[0]
    scale = 1.0 / math.sqrt(dk)
    f32, bf16 = jnp.float32, jnp.bfloat16

    if tq is None:
        tq = min(L, 256)          # 256 fills the v6e/v7x MXU; use 128 on v5e builds
    assert L % tq == 0 and (tq == L or tq % 8 == 0)

    # bf16 MXU weights; attention scale folded into the Q projection once here.
    wq = (params["wq"] * scale).astype(bf16)
    wk = params["wk"].astype(bf16)
    wv = params["wv"].astype(bf16)
    wo = params["wo"].astype(bf16)
    w1 = params["w1"].astype(bf16)
    w2 = params["w2"].astype(bf16)

    bq = (params["bq"] * scale).reshape(1, D).astype(f32)
    bk = params["bk"].reshape(1, D).astype(f32)
    bv = params["bv"].reshape(1, D).astype(f32)
    bo = params["bo"].reshape(1, D).astype(f32)
    b1 = params["b1"].reshape(1, F).astype(f32)
    b2 = params["b2"].reshape(1, D).astype(f32)

    def rep(shape):               # constant-index (replicated) operand
        nd = len(shape)
        return pl.BlockSpec(shape, lambda b, q: (0,) * nd)

    return pl.pallas_call(
        functools.partial(_encoder_layer_kernel, H),
        out_shape=jax.ShapeDtypeStruct((B, L, D), x.dtype),
        grid=(B, L // tq),
        in_specs=[
            pl.BlockSpec((1, tq, D), lambda b, q: (b, q, 0)),   # x: query rows
            pl.BlockSpec((1, L, D), lambda b, q: (b, 0, 0)),    # x: full seq (K/V)
            pl.BlockSpec((1, 1, L), lambda b, q: (b, 0, 0)),    # src_mask
            rep((1, D)), rep((1, D)),                           # norm_1 alpha/bias
            rep((D, D)), rep((1, D)),                           # Wq, bq
            rep((D, D)), rep((1, D)),                           # Wk, bk
            rep((D, D)), rep((1, D)),                           # Wv, bv
            rep((D, D)), rep((1, D)),                           # Wo, bo
            rep((1, D)), rep((1, D)),                           # norm_2 alpha/bias
            rep((D, F)), rep((1, F)),                           # W1, b1
            rep((F, D)), rep((1, D)),                           # W2, b2
        ],
        out_specs=pl.BlockSpec((1, tq, D), lambda b, q: (b, q, 0)),
        compiler_params=pltpu.CompilerParams(
            dimension_semantics=("parallel", "parallel"),
            vmem_limit_bytes=48 * 1024 * 1024),
    )(x, x, src_mask.astype(f32),
      params["ln1_a"].reshape(1, D).astype(f32),
      params["ln1_b"].reshape(1, D).astype(f32),
      wq, bq, wk, bk, wv, bv, wo, bo,
      params["ln2_a"].reshape(1, D).astype(f32),
      params["ln2_b"].reshape(1, D).astype(f32),
      w1, b1, w2, b2)


# ---------------------------------------------------------------------------
# Deterministic parameter init
# ---------------------------------------------------------------------------
def init_params(key, d_model, d_ff):
    ks = jax.random.split(key, 12)

    def w(k, i, o):
        return jax.random.normal(k, (i, o), jnp.float32) * 0.02

    def b(k, n):
        return jax.random.normal(k, (n,), jnp.float32) * 0.02

    return {
        "ln1_a": jnp.ones((d_model,), jnp.float32),
        "ln1_b": jnp.zeros((d_model,), jnp.float32),
        "ln2_a": jnp.ones((d_model,), jnp.float32),
        "ln2_b": jnp.zeros((d_model,), jnp.float32),
        "wq": w(ks[0], d_model, d_model), "bq": b(ks[1], d_model),
        "wk": w(ks[2], d_model, d_model), "bk": b(ks[3], d_model),
        "wv": w(ks[4], d_model, d_model), "bv": b(ks[5], d_model),
        "wo": w(ks[6], d_model, d_model), "bo": b(ks[7], d_model),
        "w1": w(ks[8], d_model, d_ff),   "b1": b(ks[9], d_ff),
        "w2": w(ks[10], d_ff, d_model),  "b2": b(ks[11], d_model),
    }


if __name__ == "__main__":
    B, L, D, H, F = 2, 16, 32, 4, 64

    key = jax.random.PRNGKey(0)
    kx, kp = jax.random.split(key)

    x = jax.random.normal(kx, (B, L, D), jnp.float32)
    # src_mask: (B, 1, L); 1 = attend, 0 = masked key position.
    src_mask = jnp.ones((B, 1, L), jnp.float32).at[:, :, L - 3:].set(0.0)

    params = init_params(kp, D, F)

    out = encoder_layer(x, src_mask, params, heads=H, tq=8)   # grid = (2, 2)
    jax.block_until_ready(out)

    assert out.shape == (B, L, D)
    assert bool(jnp.all(jnp.isfinite(out)))
    print("KERNEL_OK")
</pallas_src>

<mosaic_0001>
module attributes {stable_mosaic.version = 11 : i64} {
  func.func @_encoder_layer_kernel(%arg0: i32, %arg1: i32, %arg2: memref<1x8x32xf32, #tpu.memory_space<vmem>>, %arg3: memref<1x16x32xf32, #tpu.memory_space<vmem>>, %arg4: memref<1x1x16xf32, #tpu.memory_space<vmem>>, %arg5: memref<1x32xf32, #tpu.memory_space<vmem>>, %arg6: memref<1x32xf32, #tpu.memory_space<vmem>>, %arg7: memref<32x32xbf16, #tpu.memory_space<vmem>>, %arg8: memref<1x32xf32, #tpu.memory_space<vmem>>, %arg9: memref<32x32xbf16, #tpu.memory_space<vmem>>, %arg10: memref<1x32xf32, #tpu.memory_space<vmem>>, %arg11: memref<32x32xbf16, #tpu.memory_space<vmem>>, %arg12: memref<1x32xf32, #tpu.memory_space<vmem>>, %arg13: memref<32x32xbf16, #tpu.memory_space<vmem>>, %arg14: memref<1x32xf32, #tpu.memory_space<vmem>>, %arg15: memref<1x32xf32, #tpu.memory_space<vmem>>, %arg16: memref<1x32xf32, #tpu.memory_space<vmem>>, %arg17: memref<32x64xbf16, #tpu.memory_space<vmem>>, %arg18: memref<1x64xf32, #tpu.memory_space<vmem>>, %arg19: memref<64x32xbf16, #tpu.memory_space<vmem>>, %arg20: memref<1x32xf32, #tpu.memory_space<vmem>>, %arg21: memref<1x8x32xf32, #tpu.memory_space<vmem>>) attributes {dimension_semantics = [#tpu.dimension_semantics<parallel>, #tpu.dimension_semantics<parallel>], iteration_bounds = array<i64: 2, 2>, scalar_prefetch = 0 : i64, scratch_operands = 0 : i64, tpu.core_type = #tpu.core_type<tc>, window_params = [{transform_indices = @transform_0, window_bounds = array<i64: 1, 8, 32>}, {transform_indices = @transform_1, window_bounds = array<i64: 1, 16, 32>}, {transform_indices = @transform_2, window_bounds = array<i64: 1, 1, 16>}, {pipeline_mode = #tpu.pipeline_mode<synchronous>, transform_indices = @transform_3, window_bounds = array<i64: 1, 32>}, {pipeline_mode = #tpu.pipeline_mode<synchronous>, transform_indices = @transform_4, window_bounds = array<i64: 1, 32>}, {pipeline_mode = #tpu.pipeline_mode<synchronous>, transform_indices = @transform_5, window_bounds = array<i64: 32, 32>}, {pipeline_mode = #tpu.pipeline_mode<synchronous>, transform_indices = @transform_6, window_bounds = array<i64: 1, 32>}, {pipeline_mode = #tpu.pipeline_mode<synchronous>, transform_indices = @transform_7, window_bounds = array<i64: 32, 32>}, {pipeline_mode = #tpu.pipeline_mode<synchronous>, transform_indices = @transform_8, window_bounds = array<i64: 1, 32>}, {pipeline_mode = #tpu.pipeline_mode<synchronous>, transform_indices = @transform_9, window_bounds = array<i64: 32, 32>}, {pipeline_mode = #tpu.pipeline_mode<synchronous>, transform_indices = @transform_10, window_bounds = array<i64: 1, 32>}, {pipeline_mode = #tpu.pipeline_mode<synchronous>, transform_indices = @transform_11, window_bounds = array<i64: 32, 32>}, {pipeline_mode = #tpu.pipeline_mode<synchronous>, transform_indices = @transform_12, window_bounds = array<i64: 1, 32>}, {pipeline_mode = #tpu.pipeline_mode<synchronous>, transform_indices = @transform_13, window_bounds = array<i64: 1, 32>}, {pipeline_mode = #tpu.pipeline_mode<synchronous>, transform_indices = @transform_14, window_bounds = array<i64: 1, 32>}, {pipeline_mode = #tpu.pipeline_mode<synchronous>, transform_indices = @transform_15, window_bounds = array<i64: 32, 64>}, {pipeline_mode = #tpu.pipeline_mode<synchronous>, transform_indices = @transform_16, window_bounds = array<i64: 1, 64>}, {pipeline_mode = #tpu.pipeline_mode<synchronous>, transform_indices = @transform_17, window_bounds = array<i64: 64, 32>}, {pipeline_mode = #tpu.pipeline_mode<synchronous>, transform_indices = @transform_18, window_bounds = array<i64: 1, 32>}, {transform_indices = @transform_19, window_bounds = array<i64: 1, 8, 32>}]} {
    %c0 = arith.constant 0 : index
    %c0_0 = arith.constant 0 : index
    %c0_1 = arith.constant 0 : index
    %0 = vector.load %arg2[%c0, %c0_0, %c0_1] : memref<1x8x32xf32, #tpu.memory_space<vmem>>, vector<1x8x32xf32>
    %1 = vector.shape_cast %0 : vector<1x8x32xf32> to vector<8x32xf32>
    %c0_2 = arith.constant 0 : index
    %c0_3 = arith.constant 0 : index
    %c0_4 = arith.constant 0 : index
    %2 = vector.load %arg3[%c0_2, %c0_3, %c0_4] : memref<1x16x32xf32, #tpu.memory_space<vmem>>, vector<1x16x32xf32>
    %3 = vector.shape_cast %2 : vector<1x16x32xf32> to vector<16x32xf32>
    %cst = arith.constant dense<0.000000e+00> : vector<8xf32>
    %4 = vector.multi_reduction <add>, %1, %cst [1] : vector<8x32xf32> to vector<8xf32>
    %5 = vector.shape_cast %4 : vector<8xf32> to vector<8x1xf32>
    %cst_5 = arith.constant 3.200000e+01 : f32
    %6 = vector.broadcast %cst_5 : f32 to vector<8x1xf32>
    %7 = arith.divf %5, %6 : vector<8x1xf32>
    %8 = vector.broadcast %7 : vector<8x1xf32> to vector<8x32xf32>
    %9 = arith.subf %1, %8 : vector<8x32xf32>
    %10 = arith.mulf %9, %9 : vector<8x32xf32>
    %cst_6 = arith.constant dense<0.000000e+00> : vector<8xf32>
    %11 = vector.multi_reduction <add>, %10, %cst_6 [1] : vector<8x32xf32> to vector<8xf32>
    %12 = vector.shape_cast %11 : vector<8xf32> to vector<8x1xf32>
    %cst_7 = arith.constant 0.0322580636 : f32
    %13 = vector.broadcast %cst_7 : f32 to vector<8x1xf32>
    %14 = arith.mulf %12, %13 : vector<8x1xf32>
    %c0_8 = arith.constant 0 : index
    %c0_9 = arith.constant 0 : index
    %15 = vector.load %arg5[%c0_8, %c0_9] : memref<1x32xf32, #tpu.memory_space<vmem>>, vector<1x32xf32>
    %16 = vector.broadcast %15 : vector<1x32xf32> to vector<8x32xf32>
    %17 = arith.mulf %16, %9 : vector<8x32xf32>
    %18 = math.sqrt %14 : vector<8x1xf32>
    %cst_10 = arith.constant 9.99999997E-7 : f32
    %19 = vector.broadcast %cst_10 : f32 to vector<8x1xf32>
    %20 = arith.addf %18, %19 : vector<8x1xf32>
    %21 = vector.broadcast %20 : vector<8x1xf32> to vector<8x32xf32>
    %22 = arith.divf %17, %21 : vector<8x32xf32>
    %c0_11 = arith.constant 0 : index
    %c0_12 = arith.constant 0 : index
    %23 = vector.load %arg6[%c0_11, %c0_12] : memref<1x32xf32, #tpu.memory_space<vmem>>, vector<1x32xf32>
    %24 = vector.broadcast %23 : vector<1x32xf32> to vector<8x32xf32>
    %25 = arith.addf %22, %24 : vector<8x32xf32>
    %26 = arith.truncf %25 : vector<8x32xf32> to vector<8x32xbf16>
    %cst_13 = arith.constant dense<0.000000e+00> : vector<16xf32>
    %27 = vector.multi_reduction <add>, %3, %cst_13 [1] : vector<16x32xf32> to vector<16xf32>
    %28 = vector.shape_cast %27 : vector<16xf32> to vector<16x1xf32>
    %cst_14 = arith.constant 3.200000e+01 : f32
    %29 = vector.broadcast %cst_14 : f32 to vector<16x1xf32>
    %30 = arith.divf %28, %29 : vector<16x1xf32>
    %31 = vector.broadcast %30 : vector<16x1xf32> to vector<16x32xf32>
    %32 = arith.subf %3, %31 : vector<16x32xf32>
    %33 = arith.mulf %32, %32 : vector<16x32xf32>
    %cst_15 = arith.constant dense<0.000000e+00> : vector<16xf32>
    %34 = vector.multi_reduction <add>, %33, %cst_15 [1] : vector<16x32xf32> to vector<16xf32>
    %35 = vector.shape_cast %34 : vector<16xf32> to vector<16x1xf32>
    %cst_16 = arith.constant 0.0322580636 : f32
    %36 = vector.broadcast %cst_16 : f32 to vector<16x1xf32>
    %37 = arith.mulf %35, %36 : vector<16x1xf32>
    %c0_17 = arith.constant 0 : index
    %c0_18 = arith.constant 0 : index
    %38 = vector.load %arg5[%c0_17, %c0_18] : memref<1x32xf32, #tpu.memory_space<vmem>>, vector<1x32xf32>
    %39 = vector.broadcast %38 : vector<1x32xf32> to vector<16x32xf32>
    %40 = arith.mulf %39, %32 : vector<16x32xf32>
    %41 = math.sqrt %37 : vector<16x1xf32>
    %cst_19 = arith.constant 9.99999997E-7 : f32
    %42 = vector.broadcast %cst_19 : f32 to vector<16x1xf32>
    %43 = arith.addf %41, %42 : vector<16x1xf32>
    %44 = vector.broadcast %43 : vector<16x1xf32> to vector<16x32xf32>
    %45 = arith.divf %40, %44 : vector<16x32xf32>
    %c0_20 = arith.constant 0 : index
    %c0_21 = arith.constant 0 : index
    %46 = vector.load %arg6[%c0_20, %c0_21] : memref<1x32xf32, #tpu.memory_space<vmem>>, vector<1x32xf32>
    %47 = vector.broadcast %46 : vector<1x32xf32> to vector<16x32xf32>
    %48 = arith.addf %45, %47 : vector<16x32xf32>
    %49 = arith.truncf %48 : vector<16x32xf32> to vector<16x32xbf16>
    %c0_22 = arith.constant 0 : index
    %c0_23 = arith.constant 0 : index
    %50 = vector.load %arg7[%c0_22, %c0_23] : memref<32x32xbf16, #tpu.memory_space<vmem>>, vector<32x32xbf16>
    %cst_24 = arith.constant dense<0.000000e+00> : vector<8x32xf32>
    %51 = tpu.matmul %26, %50, %cst_24 {dimension_numbers = #tpu.dot_dimension_numbers<[1], [0], [0], [1], [0, 0, 1, 1], [], []>} : vector<8x32xbf16>, vector<32x32xbf16>, vector<8x32xf32> -> vector<8x32xf32>
    %c0_25 = arith.constant 0 : index
    %c0_26 = arith.constant 0 : index
    %52 = vector.load %arg8[%c0_25, %c0_26] : memref<1x32xf32, #tpu.memory_space<vmem>>, vector<1x32xf32>
    %53 = vector.broadcast %52 : vector<1x32xf32> to vector<8x32xf32>
    %54 = arith.addf %51, %53 : vector<8x32xf32>
    %55 = arith.truncf %54 : vector<8x32xf32> to vector<8x32xbf16>
    %c0_27 = arith.constant 0 : index
    %c0_28 = arith.constant 0 : index
    %56 = vector.load %arg9[%c0_27, %c0_28] : memref<32x32xbf16, #tpu.memory_space<vmem>>, vector<32x32xbf16>
    %cst_29 = arith.constant dense<0.000000e+00> : vector<16x32xf32>
    %57 = tpu.matmul %49, %56, %cst_29 {dimension_numbers = #tpu.dot_dimension_numbers<[1], [0], [0], [1], [0, 0, 1, 1], [], []>} : vector<16x32xbf16>, vector<32x32xbf16>, vector<16x32xf32> -> vector<16x32xf32>
    %c0_30 = arith.constant 0 : index
    %c0_31 = arith.constant 0 : index
    %58 = vector.load %arg10[%c0_30, %c0_31] : memref<1x32xf32, #tpu.memory_space<vmem>>, vector<1x32xf32>
    %59 = vector.broadcast %58 : vector<1x32xf32> to vector<16x32xf32>
    %60 = arith.addf %57, %59 : vector<16x32xf32>
    %61 = arith.truncf %60 : vector<16x32xf32> to vector<16x32xbf16>
    %c0_32 = arith.constant 0 : index
    %c0_33 = arith.constant 0 : index
    %62 = vector.load %arg11[%c0_32, %c0_33] : memref<32x32xbf16, #tpu.memory_space<vmem>>, vector<32x32xbf16>
    %cst_34 = arith.constant dense<0.000000e+00> : vector<16x32xf32>
    %63 = tpu.matmul %49, %62, %cst_34 {dimension_numbers = #tpu.dot_dimension_numbers<[1], [0], [0], [1], [0, 0, 1, 1], [], []>} : vector<16x32xbf16>, vector<32x32xbf16>, vector<16x32xf32> -> vector<16x32xf32>
    %c0_35 = arith.constant 0 : index
    %c0_36 = arith.constant 0 : index
    %64 = vector.load %arg12[%c0_35, %c0_36] : memref<1x32xf32, #tpu.memory_space<vmem>>, vector<1x32xf32>
    %65 = vector.broadcast %64 : vector<1x32xf32> to vector<16x32xf32>
    %66 = arith.addf %63, %65 : vector<16x32xf32>
    %67 = arith.truncf %66 : vector<16x32xf32> to vector<16x32xbf16>
    %c0_37 = arith.constant 0 : index
    %c0_38 = arith.constant 0 : index
    %c0_39 = arith.constant 0 : index
    %68 = vector.load %arg4[%c0_37, %c0_38, %c0_39] : memref<1x1x16xf32, #tpu.memory_space<vmem>>, vector<1x1x16xf32>
    %69 = vector.shape_cast %68 : vector<1x1x16xf32> to vector<1x16xf32>
    %cst_40 = arith.constant 0.000000e+00 : f32
    %70 = vector.broadcast %cst_40 : f32 to vector<1x16xf32>
    %71 = arith.cmpf oeq, %69, %70 : vector<1x16xf32>
    %72 = vector.extract_strided_slice %55 {offsets = [0, 0], sizes = [8, 8], strides = [1, 1]} : vector<8x32xbf16> to vector<8x8xbf16>
    %73 = vector.extract_strided_slice %61 {offsets = [0, 0], sizes = [16, 8], strides = [1, 1]} : vector<16x32xbf16> to vector<16x8xbf16>
    "tpu.trace_start"() <{level = 10 : i32, message = "qc,kc->qk"}> : () -> ()
    %cst_41 = arith.constant dense<0.000000e+00> : vector<8x16xf32>
    %74 = tpu.matmul %72, %73, %cst_41 {dimension_numbers = #tpu.dot_dimension_numbers<[1], [1], [0], [0], [0, 0, 1, 0], [], []>} : vector<8x8xbf16>, vector<16x8xbf16>, vector<8x16xf32> -> vector<8x16xf32>
    %cst_42 = arith.constant -1.000000e+09 : f32
    "tpu.trace_stop"() : () -> ()
    %75 = vector.shape_cast %71 : vector<1x16xi1> to vector<1x16xi1>
    %76 = vector.broadcast %75 : vector<1x16xi1> to vector<8x16xi1>
    %77 = vector.broadcast %cst_42 : f32 to vector<8x16xf32>
    %78 = arith.select %76, %77, %74 : vector<8x16xi1>, vector<8x16xf32>
    %cst_43 = arith.constant dense<0xFF800000> : vector<8xf32>
    %79 = vector.multi_reduction <maximumf>, %78, %cst_43 [1] : vector<8x16xf32> to vector<8xf32>
    %80 = vector.shape_cast %79 : vector<8xf32> to vector<8x1xf32>
    %81 = vector.broadcast %80 : vector<8x1xf32> to vector<8x16xf32>
    %82 = arith.subf %78, %81 : vector<8x16xf32>
    %83 = math.exp %82 : vector<8x16xf32>
    %cst_44 = arith.constant dense<0.000000e+00> : vector<8xf32>
    %84 = vector.multi_reduction <add>, %83, %cst_44 [1] : vector<8x16xf32> to vector<8xf32>
    %85 = vector.shape_cast %84 : vector<8xf32> to vector<8x1xf32>
    %86 = tpu.reciprocal %85 {approx = true} : vector<8x1xf32> -> vector<8x1xf32>
    %87 = vector.broadcast %86 : vector<8x1xf32> to vector<8x16xf32>
    %88 = arith.mulf %83, %87 : vector<8x16xf32>
    %89 = arith.truncf %88 : vector<8x16xf32> to vector<8x16xbf16>
    %90 = vector.extract_strided_slice %67 {offsets = [0, 0], sizes = [16, 8], strides = [1, 1]} : vector<16x32xbf16> to vector<16x8xbf16>
    %cst_45 = arith.constant dense<0.000000e+00> : vector<8x8xf32>
    %91 = tpu.matmul %89, %90, %cst_45 {dimension_numbers = #tpu.dot_dimension_numbers<[1], [0], [0], [1], [0, 0, 1, 1], [], []>} : vector<8x16xbf16>, vector<16x8xbf16>, vector<8x8xf32> -> vector<8x8xf32>
    %92 = arith.truncf %91 : vector<8x8xf32> to vector<8x8xbf16>
    %93 = vector.extract_strided_slice %55 {offsets = [0, 8], sizes = [8, 8], strides = [1, 1]} : vector<8x32xbf16> to vector<8x8xbf16>
    %94 = vector.extract_strided_slice %61 {offsets = [0, 8], sizes = [16, 8], strides = [1, 1]} : vector<16x32xbf16> to vector<16x8xbf16>
    "tpu.trace_start"() <{level = 10 : i32, message = "qc,kc->qk"}> : () -> ()
    %cst_46 = arith.constant dense<0.000000e+00> : vector<8x16xf32>
    %95 = tpu.matmul %93, %94, %cst_46 {dimension_numbers = #tpu.dot_dimension_numbers<[1], [1], [0], [0], [0, 0, 1, 0], [], []>} : vector<8x8xbf16>, vector<16x8xbf16>, vector<8x16xf32> -> vector<8x16xf32>
    %cst_47 = arith.constant -1.000000e+09 : f32
    "tpu.trace_stop"() : () -> ()
    %96 = vector.shape_cast %71 : vector<1x16xi1> to vector<1x16xi1>
    %97 = vector.broadcast %96 : vector<1x16xi1> to vector<8x16xi1>
    %98 = vector.broadcast %cst_47 : f32 to vector<8x16xf32>
    %99 = arith.select %97, %98, %95 : vector<8x16xi1>, vector<8x16xf32>
    %cst_48 = arith.constant dense<0xFF800000> : vector<8xf32>
    %100 = vector.multi_reduction <maximumf>, %99, %cst_48 [1] : vector<8x16xf32> to vector<8xf32>
    %101 = vector.shape_cast %100 : vector<8xf32> to vector<8x1xf32>
    %102 = vector.broadcast %101 : vector<8x1xf32> to vector<8x16xf32>
    %103 = arith.subf %99, %102 : vector<8x16xf32>
    %104 = math.exp %103 : vector<8x16xf32>
    %cst_49 = arith.constant dense<0.000000e+00> : vector<8xf32>
    %105 = vector.multi_reduction <add>, %104, %cst_49 [1] : vector<8x16xf32> to vector<8xf32>
    %106 = vector.shape_cast %105 : vector<8xf32> to vector<8x1xf32>
    %107 = tpu.reciprocal %106 {approx = true} : vector<8x1xf32> -> vector<8x1xf32>
    %108 = vector.broadcast %107 : vector<8x1xf32> to vector<8x16xf32>
    %109 = arith.mulf %104, %108 : vector<8x16xf32>
    %110 = arith.truncf %109 : vector<8x16xf32> to vector<8x16xbf16>
    %111 = vector.extract_strided_slice %67 {offsets = [0, 8], sizes = [16, 8], strides = [1, 1]} : vector<16x32xbf16> to vector<16x8xbf16>
    %cst_50 = arith.constant dense<0.000000e+00> : vector<8x8xf32>
    %112 = tpu.matmul %110, %111, %cst_50 {dimension_numbers = #tpu.dot_dimension_numbers<[1], [0], [0], [1], [0, 0, 1, 1], [], []>} : vector<8x16xbf16>, vector<16x8xbf16>, vector<8x8xf32> -> vector<8x8xf32>
    %113 = arith.truncf %112 : vector<8x8xf32> to vector<8x8xbf16>
    %114 = vector.extract_strided_slice %55 {offsets = [0, 16], sizes = [8, 8], strides = [1, 1]} : vector<8x32xbf16> to vector<8x8xbf16>
    %115 = vector.extract_strided_slice %61 {offsets = [0, 16], sizes = [16, 8], strides = [1, 1]} : vector<16x32xbf16> to vector<16x8xbf16>
    "tpu.trace_start"() <{level = 10 : i32, message = "qc,kc->qk"}> : () -> ()
    %cst_51 = arith.constant dense<0.000000e+00> : vector<8x16xf32>
    %116 = tpu.matmul %114, %115, %cst_51 {dimension_numbers = #tpu.dot_dimension_numbers<[1], [1], [0], [0], [0, 0, 1, 0], [], []>} : vector<8x8xbf16>, vector<16x8xbf16>, vector<8x16xf32> -> vector<8x16xf32>
    %cst_52 = arith.constant -1.000000e+09 : f32
    "tpu.trace_stop"() : () -> ()
    %117 = vector.shape_cast %71 : vector<1x16xi1> to vector<1x16xi1>
    %118 = vector.broadcast %117 : vector<1x16xi1> to vector<8x16xi1>
    %119 = vector.broadcast %cst_52 : f32 to vector<8x16xf32>
    %120 = arith.select %118, %119, %116 : vector<8x16xi1>, vector<8x16xf32>
    %cst_53 = arith.constant dense<0xFF800000> : vector<8xf32>
    %121 = vector.multi_reduction <maximumf>, %120, %cst_53 [1] : vector<8x16xf32> to vector<8xf32>
    %122 = vector.shape_cast %121 : vector<8xf32> to vector<8x1xf32>
    %123 = vector.broadcast %122 : vector<8x1xf32> to vector<8x16xf32>
    %124 = arith.subf %120, %123 : vector<8x16xf32>
    %125 = math.exp %124 : vector<8x16xf32>
    %cst_54 = arith.constant dense<0.000000e+00> : vector<8xf32>
    %126 = vector.multi_reduction <add>, %125, %cst_54 [1] : vector<8x16xf32> to vector<8xf32>
    %127 = vector.shape_cast %126 : vector<8xf32> to vector<8x1xf32>
    %128 = tpu.reciprocal %127 {approx = true} : vector<8x1xf32> -> vector<8x1xf32>
    %129 = vector.broadcast %128 : vector<8x1xf32> to vector<8x16xf32>
    %130 = arith.mulf %125, %129 : vector<8x16xf32>
    %131 = arith.truncf %130 : vector<8x16xf32> to vector<8x16xbf16>
    %132 = vector.extract_strided_slice %67 {offsets = [0, 16], sizes = [16, 8], strides = [1, 1]} : vector<16x32xbf16> to vector<16x8xbf16>
    %cst_55 = arith.constant dense<0.000000e+00> : vector<8x8xf32>
    %133 = tpu.matmul %131, %132, %cst_55 {dimension_numbers = #tpu.dot_dimension_numbers<[1], [0], [0], [1], [0, 0, 1, 1], [], []>} : vector<8x16xbf16>, vector<16x8xbf16>, vector<8x8xf32> -> vector<8x8xf32>
    %134 = arith.truncf %133 : vector<8x8xf32> to vector<8x8xbf16>
    %135 = vector.extract_strided_slice %55 {offsets = [0, 24], sizes = [8, 8], strides = [1, 1]} : vector<8x32xbf16> to vector<8x8xbf16>
    %136 = vector.extract_strided_slice %61 {offsets = [0, 24], sizes = [16, 8], strides = [1, 1]} : vector<16x32xbf16> to vector<16x8xbf16>
    "tpu.trace_start"() <{level = 10 : i32, message = "qc,kc->qk"}> : () -> ()
    %cst_56 = arith.constant dense<0.000000e+00> : vector<8x16xf32>
    %137 = tpu.matmul %135, %136, %cst_56 {dimension_numbers = #tpu.dot_dimension_numbers<[1], [1], [0], [0], [0, 0, 1, 0], [], []>} : vector<8x8xbf16>, vector<16x8xbf16>, vector<8x16xf32> -> vector<8x16xf32>
    %cst_57 = arith.constant -1.000000e+09 : f32
    "tpu.trace_stop"() : () -> ()
    %138 = vector.shape_cast %71 : vector<1x16xi1> to vector<1x16xi1>
    %139 = vector.broadcast %138 : vector<1x16xi1> to vector<8x16xi1>
    %140 = vector.broadcast %cst_57 : f32 to vector<8x16xf32>
    %141 = arith.select %139, %140, %137 : vector<8x16xi1>, vector<8x16xf32>
    %cst_58 = arith.constant dense<0xFF800000> : vector<8xf32>
    %142 = vector.multi_reduction <maximumf>, %141, %cst_58 [1] : vector<8x16xf32> to vector<8xf32>
    %143 = vector.shape_cast %142 : vector<8xf32> to vector<8x1xf32>
    %144 = vector.broadcast %143 : vector<8x1xf32> to vector<8x16xf32>
    %145 = arith.subf %141, %144 : vector<8x16xf32>
    %146 = math.exp %145 : vector<8x16xf32>
    %cst_59 = arith.constant dense<0.000000e+00> : vector<8xf32>
    %147 = vector.multi_reduction <add>, %146, %cst_59 [1] : vector<8x16xf32> to vector<8xf32>
    %148 = vector.shape_cast %147 : vector<8xf32> to vector<8x1xf32>
    %149 = tpu.reciprocal %148 {approx = true} : vector<8x1xf32> -> vector<8x1xf32>
    %150 = vector.broadcast %149 : vector<8x1xf32> to vector<8x16xf32>
    %151 = arith.mulf %146, %150 : vector<8x16xf32>
    %152 = arith.truncf %151 : vector<8x16xf32> to vector<8x16xbf16>
    %153 = vector.extract_strided_slice %67 {offsets = [0, 24], sizes = [16, 8], strides = [1, 1]} : vector<16x32xbf16> to vector<16x8xbf16>
    %cst_60 = arith.constant dense<0.000000e+00> : vector<8x8xf32>
    %154 = tpu.matmul %152, %153, %cst_60 {dimension_numbers = #tpu.dot_dimension_numbers<[1], [0], [0], [1], [0, 0, 1, 1], [], []>} : vector<8x16xbf16>, vector<16x8xbf16>, vector<8x8xf32> -> vector<8x8xf32>
    %155 = arith.truncf %154 : vector<8x8xf32> to vector<8x8xbf16>
    %156 = tpu.concatenate %92, %113, %134, %155 in 1 : vector<8x8xbf16>, vector<8x8xbf16>, vector<8x8xbf16>, vector<8x8xbf16> -> vector<8x32xbf16>
    %c0_61 = arith.constant 0 : index
    %c0_62 = arith.constant 0 : index
    %157 = vector.load %arg13[%c0_61, %c0_62] : memref<32x32xbf16, #tpu.memory_space<vmem>>, vector<32x32xbf16>
    %cst_63 = arith.constant dense<0.000000e+00> : vector<8x32xf32>
    %158 = tpu.matmul %156, %157, %cst_63 {dimension_numbers = #tpu.dot_dimension_numbers<[1], [0], [0], [1], [0, 0, 1, 1], [], []>} : vector<8x32xbf16>, vector<32x32xbf16>, vector<8x32xf32> -> vector<8x32xf32>
    %c0_64 = arith.constant 0 : index
    %c0_65 = arith.constant 0 : index
    %159 = vector.load %arg14[%c0_64, %c0_65] : memref<1x32xf32, #tpu.memory_space<vmem>>, vector<1x32xf32>
    %160 = vector.broadcast %159 : vector<1x32xf32> to vector<8x32xf32>
    %161 = arith.addf %158, %160 : vector<8x32xf32>
    %162 = arith.addf %161, %161 : vector<8x32xf32>
    %cst_66 = arith.constant dense<0.000000e+00> : vector<8xf32>
    %163 = vector.multi_reduction <add>, %162, %cst_66 [1] : vector<8x32xf32> to vector<8xf32>
    %164 = vector.shape_cast %163 : vector<8xf32> to vector<8x1xf32>
    %cst_67 = arith.constant 3.200000e+01 : f32
    %165 = vector.broadcast %cst_67 : f32 to vector<8x1xf32>
    %166 = arith.divf %164, %165 : vector<8x1xf32>
    %167 = vector.broadcast %166 : vector<8x1xf32> to vector<8x32xf32>
    %168 = arith.subf %162, %167 : vector<8x32xf32>
    %169 = arith.mulf %168, %168 : vector<8x32xf32>
    %cst_68 = arith.constant dense<0.000000e+00> : vector<8xf32>
    %170 = vector.multi_reduction <add>, %169, %cst_68 [1] : vector<8x32xf32> to vector<8xf32>
    %171 = vector.shape_cast %170 : vector<8xf32> to vector<8x1xf32>
    %cst_69 = arith.constant 0.0322580636 : f32
    %172 = vector.broadcast %cst_69 : f32 to vector<8x1xf32>
    %173 = arith.mulf %171, %172 : vector<8x1xf32>
    %c0_70 = arith.constant 0 : index
    %c0_71 = arith.constant 0 : index
    %174 = vector.load %arg15[%c0_70, %c0_71] : memref<1x32xf32, #tpu.memory_space<vmem>>, vector<1x32xf32>
    %175 = vector.broadcast %174 : vector<1x32xf32> to vector<8x32xf32>
    %176 = arith.mulf %175, %168 : vector<8x32xf32>
    %177 = math.sqrt %173 : vector<8x1xf32>
    %cst_72 = arith.constant 9.99999997E-7 : f32
    %178 = vector.broadcast %cst_72 : f32 to vector<8x1xf32>
    %179 = arith.addf %177, %178 : vector<8x1xf32>
    %180 = vector.broadcast %179 : vector<8x1xf32> to vector<8x32xf32>
    %181 = arith.divf %176, %180 : vector<8x32xf32>
    %c0_73 = arith.constant 0 : index
    %c0_74 = arith.constant 0 : index
    %182 = vector.load %arg16[%c0_73, %c0_74] : memref<1x32xf32, #tpu.memory_space<vmem>>, vector<1x32xf32>
    %183 = vector.broadcast %182 : vector<1x32xf32> to vector<8x32xf32>
    %184 = arith.addf %181, %183 : vector<8x32xf32>
    %185 = arith.truncf %184 : vector<8x32xf32> to vector<8x32xbf16>
    %c0_75 = arith.constant 0 : index
    %c0_76 = arith.constant 0 : index
    %186 = vector.load %arg17[%c0_75, %c0_76] : memref<32x64xbf16, #tpu.memory_space<vmem>>, vector<32x64xbf16>
    %cst_77 = arith.constant dense<0.000000e+00> : vector<8x64xf32>
    %187 = tpu.matmul %185, %186, %cst_77 {dimension_numbers = #tpu.dot_dimension_numbers<[1], [0], [0], [1], [0, 0, 1, 1], [], []>} : vector<8x32xbf16>, vector<32x64xbf16>, vector<8x64xf32> -> vector<8x64xf32>
    %c0_78 = arith.constant 0 : index
    %c0_79 = arith.constant 0 : index
    %188 = vector.load %arg18[%c0_78, %c0_79] : memref<1x64xf32, #tpu.memory_space<vmem>>, vector<1x64xf32>
    %189 = vector.broadcast %188 : vector<1x64xf32> to vector<8x64xf32>
    %190 = arith.addf %187, %189 : vector<8x64xf32>
    %cst_80 = arith.constant 0.000000e+00 : f32
    %191 = vector.broadcast %cst_80 : f32 to vector<8x64xf32>
    %192 = arith.maximumf %190, %191 : vector<8x64xf32>
    %193 = arith.truncf %192 : vector<8x64xf32> to vector<8x64xbf16>
    %c0_81 = arith.constant 0 : index
    %c0_82 = arith.constant 0 : index
    %194 = vector.load %arg19[%c0_81, %c0_82] : memref<64x32xbf16, #tpu.memory_space<vmem>>, vector<64x32xbf16>
    %cst_83 = arith.constant dense<0.000000e+00> : vector<8x32xf32>
    %195 = tpu.matmul %193, %194, %cst_83 {dimension_numbers = #tpu.dot_dimension_numbers<[1], [0], [0], [1], [0, 0, 1, 1], [], []>} : vector<8x64xbf16>, vector<64x32xbf16>, vector<8x32xf32> -> vector<8x32xf32>
    %c0_84 = arith.constant 0 : index
    %c0_85 = arith.constant 0 : index
    %196 = vector.load %arg20[%c0_84, %c0_85] : memref<1x32xf32, #tpu.memory_space<vmem>>, vector<1x32xf32>
    %197 = vector.broadcast %196 : vector<1x32xf32> to vector<8x32xf32>
    %198 = arith.addf %195, %197 : vector<8x32xf32>
    %199 = arith.addf %162, %198 : vector<8x32xf32>
    %c0_86 = arith.constant 0 : index
    %c0_87 = arith.constant 0 : index
    %c0_88 = arith.constant 0 : index
    %200 = vector.load %arg21[%c0_86, %c0_87, %c0_88] : memref<1x8x32xf32, #tpu.memory_space<vmem>>, vector<1x8x32xf32>
    %201 = vector.shape_cast %200 : vector<1x8x32xf32> to vector<8x32xf32>
    %202 = vector.shape_cast %199 : vector<8x32xf32> to vector<1x8x32xf32>
    tpu.vector_store %arg21[%c0_86, %c0_87, %c0_88], %202 {strides = array<i32>} : memref<1x8x32xf32, #tpu.memory_space<vmem>>, vector<1x8x32xf32>,
    return
  }
  func.func @transform_0(%arg0: i32, %arg1: i32) -> (i32, i32, i32) {
    %c0_i32 = arith.constant 0 : i32
    %c0_i32_0 = arith.constant 0 : i32
    return %arg0, %arg1, %c0_i32 : i32, i32, i32
  }
  func.func @transform_1(%arg0: i32, %arg1: i32) -> (i32, i32, i32) {
    %c0_i32 = arith.constant 0 : i32
    %c0_i32_0 = arith.constant 0 : i32
    %c0_i32_1 = arith.constant 0 : i32
    return %arg0, %c0_i32, %c0_i32_0 : i32, i32, i32
  }
  func.func @transform_2(%arg0: i32, %arg1: i32) -> (i32, i32, i32) {
    %c0_i32 = arith.constant 0 : i32
    %c0_i32_0 = arith.constant 0 : i32
    %c0_i32_1 = arith.constant 0 : i32
    return %arg0, %c0_i32, %c0_i32_0 : i32, i32, i32
  }
  func.func @transform_3(%arg0: i32, %arg1: i32) -> (i32, i32) {
    %c0_i32 = arith.constant 0 : i32
    %c0_i32_0 = arith.constant 0 : i32
    %c0_i32_1 = arith.constant 0 : i32
    return %c0_i32, %c0_i32_0 : i32, i32
  }
  func.func @transform_4(%arg0: i32, %arg1: i32) -> (i32, i32) {
    %c0_i32 = arith.constant 0 : i32
    %c0_i32_0 = arith.constant 0 : i32
    %c0_i32_1 = arith.constant 0 : i32
    return %c0_i32, %c0_i32_0 : i32, i32
  }
  func.func @transform_5(%arg0: i32, %arg1: i32) -> (i32, i32) {
    %c0_i32 = arith.constant 0 : i32
    %c0_i32_0 = arith.constant 0 : i32
    %c0_i32_1 = arith.constant 0 : i32
    return %c0_i32, %c0_i32_0 : i32, i32
  }
  func.func @transform_6(%arg0: i32, %arg1: i32) -> (i32, i32) {
    %c0_i32 = arith.constant 0 : i32
    %c0_i32_0 = arith.constant 0 : i32
    %c0_i32_1 = arith.constant 0 : i32
    return %c0_i32, %c0_i32_0 : i32, i32
  }
  func.func @transform_7(%arg0: i32, %arg1: i32) -> (i32, i32) {
    %c0_i32 = arith.constant 0 : i32
    %c0_i32_0 = arith.constant 0 : i32
    %c0_i32_1 = arith.constant 0 : i32
    return %c0_i32, %c0_i32_0 : i32, i32
  }
  func.func @transform_8(%arg0: i32, %arg1: i32) -> (i32, i32) {
    %c0_i32 = arith.constant 0 : i32
    %c0_i32_0 = arith.constant 0 : i32
    %c0_i32_1 = arith.constant 0 : i32
    return %c0_i32, %c0_i32_0 : i32, i32
  }
  func.func @transform_9(%arg0: i32, %arg1: i32) -> (i32, i32) {
    %c0_i32 = arith.constant 0 : i32
    %c0_i32_0 = arith.constant 0 : i32
    %c0_i32_1 = arith.constant 0 : i32
    return %c0_i32, %c0_i32_0 : i32, i32
  }
  func.func @transform_10(%arg0: i32, %arg1: i32) -> (i32, i32) {
    %c0_i32 = arith.constant 0 : i32
    %c0_i32_0 = arith.constant 0 : i32
    %c0_i32_1 = arith.constant 0 : i32
    return %c0_i32, %c0_i32_0 : i32, i32
  }
  func.func @transform_11(%arg0: i32, %arg1: i32) -> (i32, i32) {
    %c0_i32 = arith.constant 0 : i32
    %c0_i32_0 = arith.constant 0 : i32
    %c0_i32_1 = arith.constant 0 : i32
    return %c0_i32, %c0_i32_0 : i32, i32
  }
  func.func @transform_12(%arg0: i32, %arg1: i32) -> (i32, i32) {
    %c0_i32 = arith.constant 0 : i32
    %c0_i32_0 = arith.constant 0 : i32
    %c0_i32_1 = arith.constant 0 : i32
    return %c0_i32, %c0_i32_0 : i32, i32
  }
  func.func @transform_13(%arg0: i32, %arg1: i32) -> (i32, i32) {
    %c0_i32 = arith.constant 0 : i32
    %c0_i32_0 = arith.constant 0 : i32
    %c0_i32_1 = arith.constant 0 : i32
    return %c0_i32, %c0_i32_0 : i32, i32
  }
  func.func @transform_14(%arg0: i32, %arg1: i32) -> (i32, i32) {
    %c0_i32 = arith.constant 0 : i32
    %c0_i32_0 = arith.constant 0 : i32
    %c0_i32_1 = arith.constant 0 : i32
    return %c0_i32, %c0_i32_0 : i32, i32
  }
  func.func @transform_15(%arg0: i32, %arg1: i32) -> (i32, i32) {
    %c0_i32 = arith.constant 0 : i32
    %c0_i32_0 = arith.constant 0 : i32
    %c0_i32_1 = arith.constant 0 : i32
    return %c0_i32, %c0_i32_0 : i32, i32
  }
  func.func @transform_16(%arg0: i32, %arg1: i32) -> (i32, i32) {
    %c0_i32 = arith.constant 0 : i32
    %c0_i32_0 = arith.constant 0 : i32
    %c0_i32_1 = arith.constant 0 : i32
    return %c0_i32, %c0_i32_0 : i32, i32
  }
  func.func @transform_17(%arg0: i32, %arg1: i32) -> (i32, i32) {
    %c0_i32 = arith.constant 0 : i32
    %c0_i32_0 = arith.constant 0 : i32
    %c0_i32_1 = arith.constant 0 : i32
    return %c0_i32, %c0_i32_0 : i32, i32
  }
  func.func @transform_18(%arg0: i32, %arg1: i32) -> (i32, i32) {
    %c0_i32 = arith.constant 0 : i32
    %c0_i32_0 = arith.constant 0 : i32
    %c0_i32_1 = arith.constant 0 : i32
    return %c0_i32, %c0_i32_0 : i32, i32
  }
  func.func @transform_19(%arg0: i32, %arg1: i32) -> (i32, i32, i32) {
    %c0_i32 = arith.constant 0 : i32
    %c0_i32_0 = arith.constant 0 : i32
    return %arg0, %arg1, %c0_i32 : i32, i32, i32
  }
}

</mosaic_0001>

<llo_original>
// kernel: tpu_custom_call.1
$region0: #{tpu_custom_call.1}
  #allocation0 [shape = 'u32[]', space=smem, size = 0x4, offset = 0x4, fixed_abs, tag = 'smem constant byte address 0x4 - core index']
  #allocation1 [shape = 'u32[144,128]{1,0:T(1,128)}', space=vmem, size = 0x12000, scoped, tag = 'internal scratch']
  %s0 = inlined_call_operand.vmem [shape: f32[2,16,32], index: 0, kind: input, shape index: {}]
  %s1 = inlined_call_operand.hbm [shape: f32[2,16,32], index: 1, kind: input, shape index: {}]
  %s2 = inlined_call_operand.vmem [shape: f32[2,1,16], index: 2, kind: input, shape index: {}]
  %s3 = inlined_call_operand.vmem [shape: f32[1,32], index: 3, kind: input, shape index: {}]
  %s4 = inlined_call_operand.vmem [shape: f32[1,32], index: 4, kind: input, shape index: {}]
  %s5 = inlined_call_operand.vmem [shape: bf16[32,32], index: 5, kind: input, shape index: {}]
  %s6 = inlined_call_operand.vmem [shape: f32[1,32], index: 6, kind: input, shape index: {}]
  %s7 = inlined_call_operand.hbm [shape: bf16[32,32], index: 7, kind: input, shape index: {}]
  %s8 = inlined_call_operand.vmem [shape: f32[1,32], index: 8, kind: input, shape index: {}]
  %s9 = inlined_call_operand.hbm [shape: bf16[32,32], index: 9, kind: input, shape index: {}]
  %s10 = inlined_call_operand.vmem [shape: f32[1,32], index: 10, kind: input, shape index: {}]
  %s11 = inlined_call_operand.hbm [shape: bf16[32,32], index: 11, kind: input, shape index: {}]
  %s12 = inlined_call_operand.vmem [shape: f32[1,32], index: 12, kind: input, shape index: {}]
  %s13 = inlined_call_operand.vmem [shape: f32[1,32], index: 13, kind: input, shape index: {}]
  %s14 = inlined_call_operand.vmem [shape: f32[1,32], index: 14, kind: input, shape index: {}]
  %s15 = inlined_call_operand.hbm [shape: bf16[32,64], index: 15, kind: input, shape index: {}]
  %s16 = inlined_call_operand.vmem [shape: f32[1,64], index: 16, kind: input, shape index: {}]
  %s17 = inlined_call_operand.vmem [shape: bf16[64,32], index: 17, kind: input, shape index: {}]
  %s18 = inlined_call_operand.vmem [shape: f32[1,32], index: 18, kind: input, shape index: {}]
  %s19 = inlined_call_operand.hbm [shape: f32[2,16,32], index: 19, kind: output, shape index: {}]
  %s20 = sld [smem:[#allocation0]]
  $region129: #{tpu_custom_call.1} parent=0
    _
  %s22 = ssub.s32 1, %s20
  %s23 = scalar_select 0, %s22, %s20
  $region1: #{tpu_custom_call.1} parent=0
    #allocation2 [shape = 'u8[16384]{0}', space=vmem, size = 0x4000, scoped, tag = 'input window, operand 1']
    #allocation3 [shape = 's32[2]{0}', space=sflag, size = 0x8, scoped, tag = 'scoped memory for tpu_custom_call.1']
    #allocation4 [shape = 's32[2]{0}', space=sflag, size = 0x8, scoped, tag = 'scoped memory for tpu_custom_call.1']
    #allocation5 [shape = 'u8[8192]{0}', space=vmem, size = 0x2000, scoped, tag = 'input window, operand 7, single buffered']
    #allocation6 [shape = 's32[1]{0}', space=sflag, size = 0x4, scoped, tag = 'scoped memory for tpu_custom_call.1']
    #allocation7 [shape = 'u8[8192]{0}', space=vmem, size = 0x2000, scoped, tag = 'input window, operand 9, single buffered']
    #allocation8 [shape = 'u8[8192]{0}', space=vmem, size = 0x2000, scoped, tag = 'input window, operand 11, single buffered']
    #allocation9 [shape = 's32[1]{0}', space=sflag, size = 0x4, scoped, tag = 'scoped memory for tpu_custom_call.1']
    #allocation10 [shape = 'u8[8192]{0}', space=vmem, size = 0x2000, scoped, tag = 'input window, operand 15, single buffered']
    #allocation11 [shape = 'u8[8192]{0}', space=vmem, size = 0x2000, scoped, tag = 'output window, operand 0']
    %24 = vsyncpa [#allocation3], 0
    %s25 = scalar_lea.sflag [#allocation3], 1
    %26 = vsyncpa %s25, 0
    %27 = vsyncpa [#allocation6], 0
    %28 = vsyncpa [#allocation9], 0
    %29 = vsyncpa [#allocation4], 0
    %s30 = scalar_lea.sflag [#allocation4], 1
    %31 = vsyncpa %s30, 0
    loop: start=0, step=1, limit=6
    $region2: #{tpu_custom_call.1} parent=1 // loop_pre_header
      _
    $region3: #{tpu_custom_call.1} parent=1 // loop_header
      %s33 = sphi 0, %s37
      %p34 = scmp.ge.s32.totalorder %s33, 6
      %s40 = sphi 0, %s52
      %s41 = sphi 0, %s48
      %s42 = sphi 0, %s40
      %s43 = sphi 0, %s41
      %s44 = sphi 0, %s42
      %s45 = sphi 0, %s43
      %s57 = sphi 0, %s59
      %s60 = sphi 0, %s57
      %s61 = sphi 0, %s60
      %s77 = sphi 0, %s61
      %s83 = sphi 0, %s85
      %s86 = sphi 0, %s83
      %s87 = sphi 0, %s86
      %s103 = sphi 0, %s87
      %s109 = sphi 0, %s111
      %s112 = sphi 0, %s109
      %s113 = sphi 0, %s112
      %s129 = sphi 0, %s113
      %s133 = sphi 0, %s133
      %s135 = sphi 0, %s133
      %s136 = sphi 0, %s135
      %s150 = sphi 0, %s136
      %s154 = sphi 0, %s154
      %s156 = sphi 0, %s154
      %s157 = sphi 0, %s156
      %s171 = sphi 0, %s157
      %s175 = sphi 0, %s175
      %s177 = sphi 0, %s175
      %s178 = sphi 0, %s177
      %s192 = sphi 0, %s178
      %s196 = sphi 0, %s196
      %s198 = sphi 0, %s196
      %s199 = sphi 0, %s198
      %s213 = sphi 0, %s199
      %s217 = sphi 0, %s217
      %s219 = sphi 0, %s217
      %s220 = sphi 0, %s219
      %s234 = sphi 0, %s220
      %s238 = sphi 0, %s238
      %s240 = sphi 0, %s238
      %s241 = sphi 0, %s240
      %s255 = sphi 0, %s241
      %s259 = sphi 0, %s259
      %s261 = sphi 0, %s259
      %s262 = sphi 0, %s261
      %s276 = sphi 0, %s262
      %s280 = sphi 0, %s280
      %s282 = sphi 0, %s280
      %s283 = sphi 0, %s282
      %s297 = sphi 0, %s283
      %s301 = sphi 0, %s301
      %s303 = sphi 0, %s301
      %s304 = sphi 0, %s303
      %s318 = sphi 0, %s304
      %s322 = sphi 0, %s322
      %s324 = sphi 0, %s322
      %s325 = sphi 0, %s324
      %s339 = sphi 0, %s325
      %s343 = sphi 0, %s343
      %s345 = sphi 0, %s343
      %s346 = sphi 0, %s345
      %s360 = sphi 0, %s346
      %s364 = sphi 0, %s364
      %s366 = sphi 0, %s364
      %s367 = sphi 0, %s366
      %s381 = sphi 0, %s367
      %s385 = sphi 0, %s385
      %s387 = sphi 0, %s385
      %s388 = sphi 0, %s387
      %s402 = sphi 0, %s388
      %s406 = sphi 0, %s406
      %s408 = sphi 0, %s406
      %s409 = sphi 0, %s408
      %s423 = sphi 0, %s409
      %s427 = sphi 0, %s427
      %s429 = sphi 0, %s427
      %s430 = sphi 0, %s429
      %s444 = sphi 0, %s430
      %s448 = sphi 0, %s448
      %s450 = sphi 0, %s448
      %s451 = sphi 0, %s450
      %s465 = sphi 0, %s451
      %s473 = sphi 0, %s475
      %s476 = sphi 0, %s473
      %s477 = sphi 0, %s476
      %s493 = sphi 0, %s477
    $region4: #{tpu_custom_call.1} parent=1 // loop_header_branch
      %36 = sbr.rel (%p34) target = $region8
    $region5: #{tpu_custom_call.1} parent=1 // loop_body
      %s38 = ssub.s32 %s33, 1
      %s39 = ssub.s32 %s33, 2
      %s46 = sadd.s32 1, %s41
      %p47 = scmp.ge.s32.totalorder %s46, 2
      %s48 = scalar_select %p47, 0, %s46
      %s49 = sadd.s32 1, %s40
      %s50 = scalar_select %p47, %s49, %s40
      %p51 = scmp.ge.s32.totalorder %s50, 2
      %s52 = scalar_select %p51, 0, %s50
      %s53 = ssub.s32 %s40, %s52
      %s54 = ssub.s32 %s41, %s48
      %s55 = sor.u32 %s53, %s54
      %p56 = scmp.eq.s32.totalorder %s55, 0
      %s58 = sadd.s32 %s57, 1
      %s59 = scalar_select %p56, %s57, %s58
      %p62 = pneg %p56
      %p63 = scmp.eq.s32.totalorder %s33, 3
      %p64 = por %p62, %p63
      %p65 = scmp.ne.s32.totalorder %s57, %s60
      %p66 = scmp.eq.s32.totalorder %s33, 0
      %p67 = por %p65, %p66
      %p68 = scmp.ne.s32.totalorder %s57, %s60
      %p69 = scmp.eq.s32.totalorder %s38, 3
      %p70 = por %p68, %p69
      %p71 = scmp.ne.s32.totalorder %s60, %s61
      %p72 = scmp.eq.s32.totalorder %s38, 0
      %p73 = por %p71, %p72
      %p74 = scmp.ne.s32.totalorder %s60, %s61
      %p75 = scmp.eq.s32.totalorder %s39, 3
      %p76 = por %p74, %p75
      %p78 = scmp.ne.s32.totalorder %s61, %s77
      %p79 = scmp.eq.s32.totalorder %s39, 0
      %p80 = por %p78, %p79
      %s81 = ssub.s32 %s40, %s52
      %p82 = scmp.eq.s32.totalorder %s81, 0
      %s84 = sadd.s32 %s83, 1
      %s85 = scalar_select %p82, %s83, %s84
      %p88 = pneg %p82
      %p89 = scmp.eq.s32.totalorder %s33, 3
      %p90 = por %p88, %p89
      %p91 = scmp.ne.s32.totalorder %s83, %s86
      %p92 = scmp.eq.s32.totalorder %s33, 0
      %p93 = por %p91, %p92
      %p94 = scmp.ne.s32.totalorder %s83, %s86
      %p95 = scmp.eq.s32.totalorder %s38, 3
      %p96 = por %p94, %p95
      %p97 = scmp.ne.s32.totalorder %s86, %s87
      %p98 = scmp.eq.s32.totalorder %s38, 0
      %p99 = por %p97, %p98
      %p100 = scmp.ne.s32.totalorder %s86, %s87
      %p101 = scmp.eq.s32.totalorder %s39, 3
      %p102 = por %p100, %p101
      %p104 = scmp.ne.s32.totalorder %s87, %s103
      %p105 = scmp.eq.s32.totalorder %s39, 0
      %p106 = por %p104, %p105
      %s107 = ssub.s32 %s40, %s52
      %p108 = scmp.eq.s32.totalorder %s107, 0
      %s110 = sadd.s32 %s109, 1
      %s111 = scalar_select %p108, %s109, %s110
      %p114 = pneg %p108
      %p115 = scmp.eq.s32.totalorder %s33, 3
      %p116 = por %p114, %p115
      %p117 = scmp.ne.s32.totalorder %s109, %s112
      %p118 = scmp.eq.s32.totalorder %s33, 0
      %p119 = por %p117, %p118
      %p120 = scmp.ne.s32.totalorder %s109, %s112
      %p121 = scmp.eq.s32.totalorder %s38, 3
      %p122 = por %p120, %p121
      %p123 = scmp.ne.s32.totalorder %s112, %s113
      %p124 = scmp.eq.s32.totalorder %s38, 0
      %p125 = por %p123, %p124
      %p126 = scmp.ne.s32.totalorder %s112, %s113
      %p127 = scmp.eq.s32.totalorder %s39, 3
      %p128 = por %p126, %p127
      %p130 = scmp.ne.s32.totalorder %s113, %s129
      %p131 = scmp.eq.s32.totalorder %s39, 0
      %p132 = por %p130, %p131
      %s134 = sadd.s32 %s133, 1
      %p137 = scmp.eq.s32.totalorder %s33, 3
      %p138 = scmp.ne.s32.totalorder %s133, %s135
      %p139 = scmp.eq.s32.totalorder %s33, 0
      %p140 = por %p138, %p139
      %p141 = scmp.ne.s32.totalorder %s133, %s135
      %p142 = scmp.eq.s32.totalorder %s38, 3
      %p143 = por %p141, %p142
      %p144 = scmp.ne.s32.totalorder %s135, %s136
      %p145 = scmp.eq.s32.totalorder %s38, 0
      %p146 = por %p144, %p145
      %p147 = scmp.ne.s32.totalorder %s135, %s136
      %p148 = scmp.eq.s32.totalorder %s39, 3
      %p149 = por %p147, %p148
      %p151 = scmp.ne.s32.totalorder %s136, %s150
      %p152 = scmp.eq.s32.totalorder %s39, 0
      %p153 = por %p151, %p152
      %s155 = sadd.s32 %s154, 1
      %p158 = scmp.eq.s32.totalorder %s33, 3
      %p159 = scmp.ne.s32.totalorder %s154, %s156
      %p160 = scmp.eq.s32.totalorder %s33, 0
      %p161 = por %p159, %p160
      %p162 = scmp.ne.s32.totalorder %s154, %s156
      %p163 = scmp.eq.s32.totalorder %s38, 3
      %p164 = por %p162, %p163
      %p165 = scmp.ne.s32.totalorder %s156, %s157
      %p166 = scmp.eq.s32.totalorder %s38, 0
      %p167 = por %p165, %p166
      %p168 = scmp.ne.s32.totalorder %s156, %s157
      %p169 = scmp.eq.s32.totalorder %s39, 3
      %p170 = por %p168, %p169
      %p172 = scmp.ne.s32.totalorder %s157, %s171
      %p173 = scmp.eq.s32.totalorder %s39, 0
      %p174 = por %p172, %p173
      %s176 = sadd.s32 %s175, 1
      %p179 = scmp.eq.s32.totalorder %s33, 3
      %p180 = scmp.ne.s32.totalorder %s175, %s177
      %p181 = scmp.eq.s32.totalorder %s33, 0
      %p182 = por %p180, %p181
      %p183 = scmp.ne.s32.totalorder %s175, %s177
      %p184 = scmp.eq.s32.totalorder %s38, 3
      %p185 = por %p183, %p184
      %p186 = scmp.ne.s32.totalorder %s177, %s178
      %p187 = scmp.eq.s32.totalorder %s38, 0
      %p188 = por %p186, %p187
      %p189 = scmp.ne.s32.totalorder %s177, %s178
      %p190 = scmp.eq.s32.totalorder %s39, 3
      %p191 = por %p189, %p190
      %p193 = scmp.ne.s32.totalorder %s178, %s192
      %p194 = scmp.eq.s32.totalorder %s39, 0
      %p195 = por %p193, %p194
      %s197 = sadd.s32 %s196, 1
      %p200 = scmp.eq.s32.totalorder %s33, 3
      %p201 = scmp.ne.s32.totalorder %s196, %s198
      %p202 = scmp.eq.s32.totalorder %s33, 0
      %p203 = por %p201, %p202
      %p204 = scmp.ne.s32.totalorder %s196, %s198
      %p205 = scmp.eq.s32.totalorder %s38, 3
      %p206 = por %p204, %p205
      %p207 = scmp.ne.s32.totalorder %s198, %s199
      %p208 = scmp.eq.s32.totalorder %s38, 0
      %p209 = por %p207, %p208
      %p210 = scmp.ne.s32.totalorder %s198, %s199
      %p211 = scmp.eq.s32.totalorder %s39, 3
      %p212 = por %p210, %p211
      %p214 = scmp.ne.s32.totalorder %s199, %s213
      %p215 = scmp.eq.s32.totalorder %s39, 0
      %p216 = por %p214, %p215
      %s218 = sadd.s32 %s217, 1
      %p221 = scmp.eq.s32.totalorder %s33, 3
      %p222 = scmp.ne.s32.totalorder %s217, %s219
      %p223 = scmp.eq.s32.totalorder %s33, 0
      %p224 = por %p222, %p223
      %p225 = scmp.ne.s32.totalorder %s217, %s219
      %p226 = scmp.eq.s32.totalorder %s38, 3
      %p227 = por %p225, %p226
      %p228 = scmp.ne.s32.totalorder %s219, %s220
      %p229 = scmp.eq.s32.totalorder %s38, 0
      %p230 = por %p228, %p229
      %p231 = scmp.ne.s32.totalorder %s219, %s220
      %p232 = scmp.eq.s32.totalorder %s39, 3
      %p233 = por %p231, %p232
      %p235 = scmp.ne.s32.totalorder %s220, %s234
      %p236 = scmp.eq.s32.totalorder %s39, 0
      %p237 = por %p235, %p236
      %s239 = sadd.s32 %s238, 1
      %p242 = scmp.eq.s32.totalorder %s33, 3
      %p243 = scmp.ne.s32.totalorder %s238, %s240
      %p244 = scmp.eq.s32.totalorder %s33, 0
      %p245 = por %p243, %p244
      %p246 = scmp.ne.s32.totalorder %s238, %s240
      %p247 = scmp.eq.s32.totalorder %s38, 3
      %p248 = por %p246, %p247
      %p249 = scmp.ne.s32.totalorder %s240, %s241
      %p250 = scmp.eq.s32.totalorder %s38, 0
      %p251 = por %p249, %p250
      %p252 = scmp.ne.s32.totalorder %s240, %s241
      %p253 = scmp.eq.s32.totalorder %s39, 3
      %p254 = por %p252, %p253
      %p256 = scmp.ne.s32.totalorder %s241, %s255
      %p257 = scmp.eq.s32.totalorder %s39, 0
      %p258 = por %p256, %p257
      %s260 = sadd.s32 %s259, 1
      %p263 = scmp.eq.s32.totalorder %s33, 3
      %p264 = scmp.ne.s32.totalorder %s259, %s261
      %p265 = scmp.eq.s32.totalorder %s33, 0
      %p266 = por %p264, %p265
      %p267 = scmp.ne.s32.totalorder %s259, %s261
      %p268 = scmp.eq.s32.totalorder %s38, 3
      %p269 = por %p267, %p268
      %p270 = scmp.ne.s32.totalorder %s261, %s262
      %p271 = scmp.eq.s32.totalorder %s38, 0
      %p272 = por %p270, %p271
      %p273 = scmp.ne.s32.totalorder %s261, %s262
      %p274 = scmp.eq.s32.totalorder %s39, 3
      %p275 = por %p273, %p274
      %p277 = scmp.ne.s32.totalorder %s262, %s276
      %p278 = scmp.eq.s32.totalorder %s39, 0
      %p279 = por %p277, %p278
      %s281 = sadd.s32 %s280, 1
      %p284 = scmp.eq.s32.totalorder %s33, 3
      %p285 = scmp.ne.s32.totalorder %s280, %s282
      %p286 = scmp.eq.s32.totalorder %s33, 0
      %p287 = por %p285, %p286
      %p288 = scmp.ne.s32.totalorder %s280, %s282
      %p289 = scmp.eq.s32.totalorder %s38, 3
      %p290 = por %p288, %p289
      %p291 = scmp.ne.s32.totalorder %s282, %s283
      %p292 = scmp.eq.s32.totalorder %s38, 0
      %p293 = por %p291, %p292
      %p294 = scmp.ne.s32.totalorder %s282, %s283
      %p295 = scmp.eq.s32.totalorder %s39, 3
      %p296 = por %p294, %p295
      %p298 = scmp.ne.s32.totalorder %s283, %s297
      %p299 = scmp.eq.s32.totalorder %s39, 0
      %p300 = por %p298, %p299
      %s302 = sadd.s32 %s301, 1
      %p305 = scmp.eq.s32.totalorder %s33, 3
      %p306 = scmp.ne.s32.totalorder %s301, %s303
      %p307 = scmp.eq.s32.totalorder %s33, 0
      %p308 = por %p306, %p307
      %p309 = scmp.ne.s32.totalorder %s301, %s303
      %p310 = scmp.eq.s32.totalorder %s38, 3
      %p311 = por %p309, %p310
      %p312 = scmp.ne.s32.totalorder %s303, %s304
      %p313 = scmp.eq.s32.totalorder %s38, 0
      %p314 = por %p312, %p313
      %p315 = scmp.ne.s32.totalorder %s303, %s304
      %p316 = scmp.eq.s32.totalorder %s39, 3
      %p317 = por %p315, %p316
      %p319 = scmp.ne.s32.totalorder %s304, %s318
      %p320 = scmp.eq.s32.totalorder %s39, 0
      %p321 = por %p319, %p320
      %s323 = sadd.s32 %s322, 1
      %p326 = scmp.eq.s32.totalorder %s33, 3
      %p327 = scmp.ne.s32.totalorder %s322, %s324
      %p328 = scmp.eq.s32.totalorder %s33, 0
      %p329 = por %p327, %p328
      %p330 = scmp.ne.s32.totalorder %s322, %s324
      %p331 = scmp.eq.s32.totalorder %s38, 3
      %p332 = por %p330, %p331
      %p333 = scmp.ne.s32.totalorder %s324, %s325
      %p334 = scmp.eq.s32.totalorder %s38, 0
      %p335 = por %p333, %p334
      %p336 = scmp.ne.s32.totalorder %s324, %s325
      %p337 = scmp.eq.s32.totalorder %s39, 3
      %p338 = por %p336, %p337
      %p340 = scmp.ne.s32.totalorder %s325, %s339
      %p341 = scmp.eq.s32.totalorder %s39, 0
      %p342 = por %p340, %p341
      %s344 = sadd.s32 %s343, 1
      %p347 = scmp.eq.s32.totalorder %s33, 3
      %p348 = scmp.ne.s32.totalorder %s343, %s345
      %p349 = scmp.eq.s32.totalorder %s33, 0
      %p350 = por %p348, %p349
      %p351 = scmp.ne.s32.totalorder %s343, %s345
      %p352 = scmp.eq.s32.totalorder %s38, 3
      %p353 = por %p351, %p352
      %p354 = scmp.ne.s32.totalorder %s345, %s346
      %p355 = scmp.eq.s32.totalorder %s38, 0
      %p356 = por %p354, %p355
      %p357 = scmp.ne.s32.totalorder %s345, %s346
      %p358 = scmp.eq.s32.totalorder %s39, 3
      %p359 = por %p357, %p358
      %p361 = scmp.ne.s32.totalorder %s346, %s360
      %p362 = scmp.eq.s32.totalorder %s39, 0
      %p363 = por %p361, %p362
      %s365 = sadd.s32 %s364, 1
      %p368 = scmp.eq.s32.totalorder %s33, 3
      %p369 = scmp.ne.s32.totalorder %s364, %s366
      %p370 = scmp.eq.s32.totalorder %s33, 0
      %p371 = por %p369, %p370
      %p372 = scmp.ne.s32.totalorder %s364, %s366
      %p373 = scmp.eq.s32.totalorder %s38, 3
      %p374 = por %p372, %p373
      %p375 = scmp.ne.s32.totalorder %s366, %s367
      %p376 = scmp.eq.s32.totalorder %s38, 0
      %p377 = por %p375, %p376
      %p378 = scmp.ne.s32.totalorder %s366, %s367
      %p379 = scmp.eq.s32.totalorder %s39, 3
      %p380 = por %p378, %p379
      %p382 = scmp.ne.s32.totalorder %s367, %s381
      %p383 = scmp.eq.s32.totalorder %s39, 0
      %p384 = por %p382, %p383
      %s386 = sadd.s32 %s385, 1
      %p389 = scmp.eq.s32.totalorder %s33, 3
      %p390 = scmp.ne.s32.totalorder %s385, %s387
      %p391 = scmp.eq.s32.totalorder %s33, 0
      %p392 = por %p390, %p391
      %p393 = scmp.ne.s32.totalorder %s385, %s387
      %p394 = scmp.eq.s32.totalorder %s38, 3
      %p395 = por %p393, %p394
      %p396 = scmp.ne.s32.totalorder %s387, %s388
      %p397 = scmp.eq.s32.totalorder %s38, 0
      %p398 = por %p396, %p397
      %p399 = scmp.ne.s32.totalorder %s387, %s388
      %p400 = scmp.eq.s32.totalorder %s39, 3
      %p401 = por %p399, %p400
      %p403 = scmp.ne.s32.totalorder %s388, %s402
      %p404 = scmp.eq.s32.totalorder %s39, 0
      %p405 = por %p403, %p404
      %s407 = sadd.s32 %s406, 1
      %p410 = scmp.eq.s32.totalorder %s33, 3
      %p411 = scmp.ne.s32.totalorder %s406, %s408
      %p412 = scmp.eq.s32.totalorder %s33, 0
      %p413 = por %p411, %p412
      %p414 = scmp.ne.s32.totalorder %s406, %s408
      %p415 = scmp.eq.s32.totalorder %s38, 3
      %p416 = por %p414, %p415
      %p417 = scmp.ne.s32.totalorder %s408, %s409
      %p418 = scmp.eq.s32.totalorder %s38, 0
      %p419 = por %p417, %p418
      %p420 = scmp.ne.s32.totalorder %s408, %s409
      %p421 = scmp.eq.s32.totalorder %s39, 3
      %p422 = por %p420, %p421
      %p424 = scmp.ne.s32.totalorder %s409, %s423
      %p425 = scmp.eq.s32.totalorder %s39, 0
      %p426 = por %p424, %p425
      %s428 = sadd.s32 %s427, 1
      %p431 = scmp.eq.s32.totalorder %s33, 3
      %p432 = scmp.ne.s32.totalorder %s427, %s429
      %p433 = scmp.eq.s32.totalorder %s33, 0
      %p434 = por %p432, %p433
      %p435 = scmp.ne.s32.totalorder %s427, %s429
      %p436 = scmp.eq.s32.totalorder %s38, 3
      %p437 = por %p435, %p436
      %p438 = scmp.ne.s32.totalorder %s429, %s430
      %p439 = scmp.eq.s32.totalorder %s38, 0
      %p440 = por %p438, %p439
      %p441 = scmp.ne.s32.totalorder %s429, %s430
      %p442 = scmp.eq.s32.totalorder %s39, 3
      %p443 = por %p441, %p442
      %p445 = scmp.ne.s32.totalorder %s430, %s444
      %p446 = scmp.eq.s32.totalorder %s39, 0
      %p447 = por %p445, %p446
      %s449 = sadd.s32 %s448, 1
      %p452 = scmp.eq.s32.totalorder %s33, 3
      %p453 = scmp.ne.s32.totalorder %s448, %s450
      %p454 = scmp.eq.s32.totalorder %s33, 0
      %p455 = por %p453, %p454
      %p456 = scmp.ne.s32.totalorder %s448, %s450
      %p457 = scmp.eq.s32.totalorder %s38, 3
      %p458 = por %p456, %p457
      %p459 = scmp.ne.s32.totalorder %s450, %s451
      %p460 = scmp.eq.s32.totalorder %s38, 0
      %p461 = por %p459, %p460
      %p462 = scmp.ne.s32.totalorder %s450, %s451
      %p463 = scmp.eq.s32.totalorder %s39, 3
      %p464 = por %p462, %p463
      %p466 = scmp.ne.s32.totalorder %s451, %s465
      %p467 = scmp.eq.s32.totalorder %s39, 0
      %p468 = por %p466, %p467
      %s469 = ssub.s32 %s40, %s52
      %s470 = ssub.s32 %s41, %s48
      %s471 = sor.u32 %s469, %s470
      %p472 = scmp.eq.s32.totalorder %s471, 0
      %s474 = sadd.s32 %s473, 1
      %s475 = scalar_select %p472, %s473, %s474
      %p478 = pneg %p472
      %p479 = scmp.eq.s32.totalorder %s33, 3
      %p480 = por %p478, %p479
      %p481 = scmp.ne.s32.totalorder %s473, %s476
      %p482 = scmp.eq.s32.totalorder %s33, 0
      %p483 = por %p481, %p482
      %p484 = scmp.ne.s32.totalorder %s473, %s476
      %p485 = scmp.eq.s32.totalorder %s38, 3
      %p486 = por %p484, %p485
      %p487 = scmp.ne.s32.totalorder %s476, %s477
      %p488 = scmp.eq.s32.totalorder %s38, 0
      %p489 = por %p487, %p488
      %p490 = scmp.ne.s32.totalorder %s476, %s477
      %p491 = scmp.eq.s32.totalorder %s39, 3
      %p492 = por %p490, %p491
      %p494 = scmp.ne.s32.totalorder %s477, %s493
      %p495 = scmp.eq.s32.totalorder %s39, 0
      %p496 = por %p494, %p495
      %p497 = scmp.le.s32.totalorder 1, %s33
      %p498 = scmp.lt.s32.totalorder %s33, 5
      %p499 = pnand %p497, %p498
      %p500 = pneg %p499
      // Predicated region
      $region9: #{tpu_custom_call.1} parent=5 // pred_check
        _
      $region10: #{tpu_custom_call.1} parent=5 // pred_check_branch
        %502 = sbr.rel (%p499) target = $region12
      $region11: #{tpu_custom_call.1} parent=5 // pred_region
        %s503 = ssub.s32 %s33, 1
        // Predicated region
        $region13: #{tpu_custom_call.1} parent=11 // pred_check
          %p504 = pneg %p146
        $region14: #{tpu_custom_call.1} parent=11 // pred_check_branch
          %506 = sbr.rel (%p504) target = $region16
        $region15: #{tpu_custom_call.1} parent=11 // pred_region
          _
        $region16: #{tpu_custom_call.1} parent=11 // pred_fallthru
          _
        // Predicated region
        $region17: #{tpu_custom_call.1} parent=11 // pred_check
          %p507 = pneg %p167
        $region18: #{tpu_custom_call.1} parent=11 // pred_check_branch
          %509 = sbr.rel (%p507) target = $region20
        $region19: #{tpu_custom_call.1} parent=11 // pred_region
          _
        $region20: #{tpu_custom_call.1} parent=11 // pred_fallthru
          _
        // Predicated region
        $region21: #{tpu_custom_call.1} parent=11 // pred_check
          %p510 = pneg %p188
        $region22: #{tpu_custom_call.1} parent=11 // pred_check_branch
          %512 = sbr.rel (%p510) target = $region24
        $region23: #{tpu_custom_call.1} parent=11 // pred_region
          _
        $region24: #{tpu_custom_call.1} parent=11 // pred_fallthru
          _
        // Predicated region
        $region25: #{tpu_custom_call.1} parent=11 // pred_check
          %p513 = pneg %p209
        $region26: #{tpu_custom_call.1} parent=11 // pred_check_branch
          %515 = sbr.rel (%p513) target = $region28
        $region27: #{tpu_custom_call.1} parent=11 // pred_region
          _
        $region28: #{tpu_custom_call.1} parent=11 // pred_fallthru
          _
        // Predicated region
        $region29: #{tpu_custom_call.1} parent=11 // pred_check
          %p516 = pneg %p230
        $region30: #{tpu_custom_call.1} parent=11 // pred_check_branch
          %518 = sbr.rel (%p516) target = $region32
        $region31: #{tpu_custom_call.1} parent=11 // pred_region
          %s520 = ssub.s32 256, 256
          %521 = vsyncadd [#allocation6], %s520
          %s522 = sshll.u32 [#allocation5], 4
          %s523 = int_to_ptr.vmem [resolvable:$true] %s522
          %528 = dma.hbm_to_vmem [thread:$0]  %s7, 256, %s523, [#allocation6], 64, 64, 4
        $region32: #{tpu_custom_call.1} parent=11 // pred_fallthru
          _
        // Predicated region
        $region33: #{tpu_custom_call.1} parent=11 // pred_check
          %p529 = pneg %p251
        $region34: #{tpu_custom_call.1} parent=11 // pred_check_branch
          %531 = sbr.rel (%p529) target = $region36
        $region35: #{tpu_custom_call.1} parent=11 // pred_region
          _
        $region36: #{tpu_custom_call.1} parent=11 // pred_fallthru
          _
        // Predicated region
        $region37: #{tpu_custom_call.1} parent=11 // pred_check
          %p532 = pneg %p272
        $region38: #{tpu_custom_call.1} parent=11 // pred_check_branch
          %534 = sbr.rel (%p532) target = $region40
        $region39: #{tpu_custom_call.1} parent=11 // pred_region
          %s536 = ssub.s32 256, 256
          %537 = vsyncadd [#allocation6], %s536
          %s538 = sshll.u32 [#allocation7], 4
          %s539 = int_to_ptr.vmem [resolvable:$true] %s538
          %544 = dma.hbm_to_vmem [thread:$0]  %s9, 256, %s539, [#allocation6], 64, 64, 4
        $region40: #{tpu_custom_call.1} parent=11 // pred_fallthru
          _
        // Predicated region
        $region41: #{tpu_custom_call.1} parent=11 // pred_check
          %p545 = pneg %p293
        $region42: #{tpu_custom_call.1} parent=11 // pred_check_branch
          %547 = sbr.rel (%p545) target = $region44
        $region43: #{tpu_custom_call.1} parent=11 // pred_region
          _
        $region44: #{tpu_custom_call.1} parent=11 // pred_fallthru
          _
        // Predicated region
        $region45: #{tpu_custom_call.1} parent=11 // pred_check
          %p548 = pneg %p314
        $region46: #{tpu_custom_call.1} parent=11 // pred_check_branch
          %550 = sbr.rel (%p548) target = $region48
        $region47: #{tpu_custom_call.1} parent=11 // pred_region
          %s552 = ssub.s32 256, 256
          %553 = vsyncadd [#allocation9], %s552
          %s554 = sshll.u32 [#allocation8], 4
          %s555 = int_to_ptr.vmem [resolvable:$true] %s554
          %560 = dma.hbm_to_vmem [thread:$0]  %s11, 256, %s555, [#allocation9], 64, 64, 4
        $region48: #{tpu_custom_call.1} parent=11 // pred_fallthru
          _
        // Predicated region
        $region49: #{tpu_custom_call.1} parent=11 // pred_check
          %p561 = pneg %p335
        $region50: #{tpu_custom_call.1} parent=11 // pred_check_branch
          %563 = sbr.rel (%p561) target = $region52
        $region51: #{tpu_custom_call.1} parent=11 // pred_region
          _
        $region52: #{tpu_custom_call.1} parent=11 // pred_fallthru
          _
        // Predicated region
        $region53: #{tpu_custom_call.1} parent=11 // pred_check
          %p564 = pneg %p356
        $region54: #{tpu_custom_call.1} parent=11 // pred_check_branch
          %566 = sbr.rel (%p564) target = $region56
        $region55: #{tpu_custom_call.1} parent=11 // pred_region
          _
        $region56: #{tpu_custom_call.1} parent=11 // pred_fallthru
          _
        // Predicated region
        $region57: #{tpu_custom_call.1} parent=11 // pred_check
          %p567 = pneg %p377
        $region58: #{tpu_custom_call.1} parent=11 // pred_check_branch
          %569 = sbr.rel (%p567) target = $region60
        $region59: #{tpu_custom_call.1} parent=11 // pred_region
          _
        $region60: #{tpu_custom_call.1} parent=11 // pred_fallthru
          _
        // Predicated region
        $region61: #{tpu_custom_call.1} parent=11 // pred_check
          %p570 = pneg %p398
        $region62: #{tpu_custom_call.1} parent=11 // pred_check_branch
          %572 = sbr.rel (%p570) target = $region64
        $region63: #{tpu_custom_call.1} parent=11 // pred_region
          %s574 = ssub.s32 256, 256
          %575 = vsyncadd [#allocation9], %s574
          %s576 = sshll.u32 [#allocation10], 4
          %s577 = int_to_ptr.vmem [resolvable:$true] %s576
          %582 = dma.hbm_to_vmem [thread:$0]  %s15, 256, %s577, [#allocation9], 64, 64, 4
        $region64: #{tpu_custom_call.1} parent=11 // pred_fallthru
          _
        // Predicated region
        $region65: #{tpu_custom_call.1} parent=11 // pred_check
          %p583 = pneg %p419
        $region66: #{tpu_custom_call.1} parent=11 // pred_check_branch
          %585 = sbr.rel (%p583) target = $region68
        $region67: #{tpu_custom_call.1} parent=11 // pred_region
          _
        $region68: #{tpu_custom_call.1} parent=11 // pred_fallthru
          _
        // Predicated region
        $region69: #{tpu_custom_call.1} parent=11 // pred_check
          %p586 = pneg %p440
        $region70: #{tpu_custom_call.1} parent=11 // pred_check_branch
          %588 = sbr.rel (%p586) target = $region72
        $region71: #{tpu_custom_call.1} parent=11 // pred_region
          _
        $region72: #{tpu_custom_call.1} parent=11 // pred_fallthru
          _
        // Predicated region
        $region73: #{tpu_custom_call.1} parent=11 // pred_check
          %p589 = pneg %p461
        $region74: #{tpu_custom_call.1} parent=11 // pred_check_branch
          %591 = sbr.rel (%p589) target = $region76
        $region75: #{tpu_custom_call.1} parent=11 // pred_region
          _
        $region76: #{tpu_custom_call.1} parent=11 // pred_fallthru
          _
      $region12: #{tpu_custom_call.1} parent=5 // pred_fallthru
        _
      %p592 = scmp.lt.s32.totalorder %s33, 4
      // Predicated region
      $region77: #{tpu_custom_call.1} parent=5 // pred_check
        %p593 = pneg %p592
      $region78: #{tpu_custom_call.1} parent=5 // pred_check_branch
        %595 = sbr.rel (%p593) target = $region80
      $region79: #{tpu_custom_call.1} parent=5 // pred_region
        // Predicated region
        $region81: #{tpu_custom_call.1} parent=79 // pred_check
          %p596 = pneg %p67
        $region82: #{tpu_custom_call.1} parent=79 // pred_check_branch
          %598 = sbr.rel (%p596) target = $region84
        $region83: #{tpu_custom_call.1} parent=79 // pred_region
          %p599 = scmp.lt.s32.totalorder %s40, 1
          %s600 = scalar_select %p599, %s40, 1
          %p601 = scmp.lt.s32.totalorder %s41, 1
          %s602 = scalar_select %p601, %s41, 1
          %s603 = smul.addr %s600, 2
          %s604 = sadd.s32 %s602, %s603
          %s605 = smul.addr %s604, 8
          %s606 = scalar_lea.vmem %s0, %s605
        $region84: #{tpu_custom_call.1} parent=79 // pred_fallthru
          _
        // Predicated region
        $region85: #{tpu_custom_call.1} parent=79 // pred_check
          %p607 = pneg %p93
        $region86: #{tpu_custom_call.1} parent=79 // pred_check_branch
          %609 = sbr.rel (%p607) target = $region88
        $region87: #{tpu_custom_call.1} parent=79 // pred_region
          %s610 = sand.u32 %s83, 1
          %s611 = scalar_lea.sflag [#allocation3], %s610
          %s612 = sand.u32 %s83, 1
          %s613 = smul.addr %s612, 16
          %s614 = scalar_lea.vmem [#allocation2], %s613
          %s616 = ssub.s32 256, 256
          %617 = vsyncadd %s611, %s616
          %s618 = smul.addr %s40, 2
          %s619 = smul.addr %s618, 128
          %s620 = scalar_lea.hbm %s1, %s619
          %s621 = sshll.u32 %s614, 4
          %s622 = int_to_ptr.vmem [resolvable:$true] %s621
          %627 = dma.hbm_to_vmem [thread:$0]  %s620, 256, %s622, %s611, 128, 128, 8
        $region88: #{tpu_custom_call.1} parent=79 // pred_fallthru
          _
        // Predicated region
        $region89: #{tpu_custom_call.1} parent=79 // pred_check
          %p628 = pneg %p119
        $region90: #{tpu_custom_call.1} parent=79 // pred_check_branch
          %630 = sbr.rel (%p628) target = $region92
        $region91: #{tpu_custom_call.1} parent=79 // pred_region
          %p631 = scmp.lt.s32.totalorder %s40, 1
          %s632 = scalar_select %p631, %s40, 1
          %s633 = scalar_lea.vmem %s2, %s632
        $region92: #{tpu_custom_call.1} parent=79 // pred_fallthru
          _
      $region80: #{tpu_custom_call.1} parent=5 // pred_fallthru
        _
      %p634 = scmp.le.s32.totalorder 1, %s33
      %p635 = scmp.lt.s32.totalorder %s33, 5
      %p636 = pnand %p634, %p635
      %p637 = pneg %p636
      // Predicated region
      $region93: #{tpu_custom_call.1} parent=5 // pred_check
        _
      $region94: #{tpu_custom_call.1} parent=5 // pred_check_branch
        %639 = sbr.rel (%p636) target = $region96
      $region95: #{tpu_custom_call.1} parent=5 // pred_region
        %s640 = ssub.s32 %s33, 1
        %s641 = sand.u32 %s86, 1
        %s642 = scalar_lea.sflag [#allocation3], %s641
        %s643 = sand.u32 %s86, 1
        %s644 = smul.addr %s643, 16
        %s645 = scalar_lea.vmem [#allocation2], %s644
        // Predicated region
        $region97: #{tpu_custom_call.1} parent=95 // pred_check
          %p646 = pneg %p99
        $region98: #{tpu_custom_call.1} parent=95 // pred_check_branch
          %648 = sbr.rel (%p646) target = $region100
        $region99: #{tpu_custom_call.1} parent=95 // pred_region
          %649 = dma.done %s642, 256
        $region100: #{tpu_custom_call.1} parent=95 // pred_fallthru
          _
        // Predicated region
        $region101: #{tpu_custom_call.1} parent=95 // pred_check
          %p650 = pneg %p230
        $region102: #{tpu_custom_call.1} parent=95 // pred_check_branch
          %652 = sbr.rel (%p650) target = $region104
        $region103: #{tpu_custom_call.1} parent=95 // pred_region
          %653 = dma.done [#allocation6], 256
        $region104: #{tpu_custom_call.1} parent=95 // pred_fallthru
          _
        // Predicated region
        $region105: #{tpu_custom_call.1} parent=95 // pred_check
          %p654 = pneg %p272
        $region106: #{tpu_custom_call.1} parent=95 // pred_check_branch
          %656 = sbr.rel (%p654) target = $region108
        $region107: #{tpu_custom_call.1} parent=95 // pred_region
          %657 = dma.done [#allocation6], 256
        $region108: #{tpu_custom_call.1} parent=95 // pred_fallthru
          _
        // Predicated region
        $region109: #{tpu_custom_call.1} parent=95 // pred_check
          %p658 = pneg %p314
        $region110: #{tpu_custom_call.1} parent=95 // pred_check_branch
          %660 = sbr.rel (%p658) target = $region112
        $region111: #{tpu_custom_call.1} parent=95 // pred_region
          %661 = dma.done [#allocation9], 256
        $region112: #{tpu_custom_call.1} parent=95 // pred_fallthru
          _
        // Predicated region
        $region113: #{tpu_custom_call.1} parent=95 // pred_check
          %p662 = pneg %p398
        $region114: #{tpu_custom_call.1} parent=95 // pred_check_branch
          %664 = sbr.rel (%p662) target = $region116
        $region115: #{tpu_custom_call.1} parent=95 // pred_region
          %665 = dma.done [#allocation9], 256
        $region116: #{tpu_custom_call.1} parent=95 // pred_fallthru
          _
        %p666 = scmp.lt.s32.totalorder %s42, 1
        %s667 = scalar_select %p666, %s42, 1
        %p668 = scmp.lt.s32.totalorder %s43, 1
        %s669 = scalar_select %p668, %s43, 1
        %s670 = smul.addr %s667, 2
        %s671 = sadd.s32 %s669, %s670
        %s672 = smul.addr %s671, 8
        %s673 = scalar_lea.vmem %s0, %s672
        %p674 = pneg %p73
        %p675 = pneg %p70
        %s676 = sand.u32 %s86, 1
        %s677 = scalar_lea.sflag [#allocation3], %s676
        %s678 = sand.u32 %s86, 1
        %s679 = smul.addr %s678, 16
        %s680 = scalar_lea.vmem [#allocation2], %s679
        %p681 = pneg %p99
        %p682 = pneg %p96
        %p683 = scmp.lt.s32.totalorder %s42, 1
        %s684 = scalar_select %p683, %s42, 1
        %s685 = scalar_lea.vmem %s2, %s684
        %p686 = pneg %p125
        %p687 = pneg %p122
        %p688 = pneg %p146
        %p689 = pneg %p143
        %p690 = pneg %p167
        %p691 = pneg %p164
        %p692 = pneg %p188
        %p693 = pneg %p185
        %p694 = pneg %p209
        %p695 = pneg %p206
        %p696 = pneg %p230
        %p697 = pneg %p227
        %p698 = pneg %p251
        %p699 = pneg %p248
        %p700 = pneg %p272
        %p701 = pneg %p269
        %p702 = pneg %p293
        %p703 = pneg %p290
        %p704 = pneg %p314
        %p705 = pneg %p311
        %p706 = pneg %p335
        %p707 = pneg %p332
        %p708 = pneg %p356
        %p709 = pneg %p353
        %p710 = pneg %p377
        %p711 = pneg %p374
        %p712 = pneg %p398
        %p713 = pneg %p395
        %p714 = pneg %p419
        %p715 = pneg %p416
        %p716 = pneg %p440
        %p717 = pneg %p437
        %p718 = pneg %p461
        %p719 = pneg %p458
        %p720 = pneg %p489
        %p721 = pneg %p486
        %s722 = sand.u32 %s476, 1
        %s723 = scalar_lea.sflag [#allocation4], %s722
        %s724 = sand.u32 %s476, 1
        %s725 = smul.addr %s724, 8
        %s726 = scalar_lea.vmem [#allocation11], %s725
        %p727 = scmp.lt.s32.totalorder %s42, 1
        %s728 = scalar_select %p727, %s42, 1
        %p729 = scmp.lt.s32.totalorder %s43, 1
        %s730 = scalar_select %p729, %s43, 1
        %s731 = smul.addr %s728, 2
        %s732 = sadd.s32 %s730, %s731
        %s733 = smul.addr %s732, 8
        %s734 = scalar_lea.vmem %s0, %s733
        %p735 = scmp.lt.s32.totalorder %s42, 1
        %s736 = scalar_select %p735, %s42, 1
        %s737 = scalar_lea.vmem %s2, %s736
        %v739 = vld [vmem:[%s734] sm:$0xff]
        %v740 = vld [vmem:[%s645] sm:$0xff]
        %v741 = vld [vmem:[%s645 + $0x8] sm:$0xff]
        %vm742 = vcmask 261120
        %v743 = vsel %vm742, %v739, 0.0
        %744 = vadd.xlane.f32.xlu0 %v743
        %v745 = vpop.xlane.xlu0 %744
        %v746 = vrcp.pop 32.0
        %v747 = vmul.f32 %v745, %v746
        %v748 = vsub.f32 %v739, %v747
        %v749 = vmul.f32 %v748, %v748
        %v750 = vsel %vm742, %v749, 0.0
        %751 = vadd.xlane.f32.xlu0 %v750
        %v752 = vpop.xlane.xlu0 %751
        %v753 = vmul.f32 %v752, 0.032258064
        %v754 = vld [vmem:[%s3] sm:$0x1]
        %v756 = vlaneseq
        %v757 = vshrl.u32 %v756, 7
        %v758 = vsub.s32 0, %v757
        %v759 = vrot.slane %v754, %v758
        %v761 = vmul.f32 %v759, %v748
        %v762 = vrsqrt.pop %v753
        %v763 = vmul.f32 %v753, %v762
        %vm764 = vcmp.eq.f32.partialorder %v753, inf
        %v765 = vsel %vm764, %v753, %v763
        %vm766 = vcmp.eq.f32.partialorder %v753, 0.0
        %v767 = vand.u32 %v753, 2147483648
        %v768 = vsel %vm766, %v767, %v765
        %v769 = vadd.f32 %v768, 1e-06
        %v770 = vrcp.pop %v769
        %v771 = vmul.f32 %v761, %v770
        %v772 = vld [vmem:[%s4] sm:$0x1]
        %v774 = vlaneseq
        %v775 = vshrl.u32 %v774, 7
        %v776 = vsub.s32 0, %v775
        %v777 = vrot.slane %v772, %v776
        %v779 = vadd.f32 %v771, %v777
        %v780 = vpack.c.bf16 %v779, %v779
        %v781 = vsel %vm742, %v740, 0.0
        %782 = vadd.xlane.f32.xlu0 %v781
        %v783 = vpop.xlane.xlu0 %782
        %v784 = vsel %vm742, %v741, 0.0
        %785 = vadd.xlane.f32.xlu0 %v784
        %v786 = vpop.xlane.xlu0 %785
        %v787 = vmul.f32 %v783, %v746
        %v788 = vmul.f32 %v786, %v746
        %v789 = vsub.f32 %v740, %v787
        %v790 = vsub.f32 %v741, %v788
        %v791 = vmul.f32 %v789, %v789
        %v792 = vmul.f32 %v790, %v790
        %v793 = vsel %vm742, %v791, 0.0
        %794 = vadd.xlane.f32.xlu0 %v793
        %v795 = vpop.xlane.xlu0 %794
        %v796 = vsel %vm742, %v792, 0.0
        %797 = vadd.xlane.f32.xlu0 %v796
        %v798 = vpop.xlane.xlu0 %797
        %v799 = vmul.f32 %v795, 0.032258064
        %v800 = vmul.f32 %v798, 0.032258064
        %v801 = vmul.f32 %v759, %v789
        %v802 = vmul.f32 %v759, %v790
        %v803 = vrsqrt.pop %v799
        %v804 = vmul.f32 %v799, %v803
        %vm805 = vcmp.eq.f32.partialorder %v799, inf
        %v806 = vsel %vm805, %v799, %v804
        %vm807 = vcmp.eq.f32.partialorder %v799, 0.0
        %v808 = vand.u32 %v799, 2147483648
        %v809 = vsel %vm807, %v808, %v806
        %v810 = vrsqrt.pop %v800
        %v811 = vmul.f32 %v800, %v810
        %vm812 = vcmp.eq.f32.partialorder %v800, inf
        %v813 = vsel %vm812, %v800, %v811
        %vm814 = vcmp.eq.f32.partialorder %v800, 0.0
        %v815 = vand.u32 %v800, 2147483648
        %v816 = vsel %vm814, %v815, %v813
        %v817 = vadd.f32 %v809, 1e-06
        %v818 = vadd.f32 %v816, 1e-06
        %v819 = vrcp.pop %v817
        %v820 = vmul.f32 %v801, %v819
        %v821 = vrcp.pop %v818
        %v822 = vmul.f32 %v802, %v821
        %v823 = vadd.f32 %v820, %v777
        %v824 = vadd.f32 %v822, %v777
        %v825 = vpack.c.bf16 %v824, %v823
        %v826 = vld [vmem:[%s5] sm:$0xf]
        %v827 = vld [vmem:[%s5 + $0x4] sm:$0xf]
        %v828 = vld [vmem:[%s5 + $0x8] sm:$0xf]
        %v829 = vld [vmem:[%s5 + $0xc] sm:$0xf]
        %v830 = vld [vmem:[%s6] sm:$0x1]
        %v832 = vlaneseq
        %v833 = vshrl.u32 %v832, 7
        %v834 = vsub.s32 0, %v833
        %v835 = vrot.slane %v830, %v834
        %v841 = vunpack.c.l.b16 %v826
        %v842 = vunpack.c.l.b16 %v827
        %v843 = vunpack.c.l.b16 %v828
        %v844 = vunpack.c.l.b16 %v829
        %v845 = vpack.c.b16 %v842, %v841
        %v846 = vpack.c.b16 %v844, %v843
        %v850 = vsel %vm742, %v780, 0
        %852 = vmatprep.subr.bf16.mxu0 0
        %853 = vmatpush1.bf16.msra.mxu0 0
        %854 = vmatprep.subr.bf16.mxu0 0
        %855 = vmatpush1.bf16.msra.mxu0 0
        %856 = vmatprep.subr.bf16.mxu0 0
        %857 = vmatpush1.bf16.msra.mxu0 0
        %858 = vmatprep.subr.bf16.mxu0 0
        %859 = vmatpush1.bf16.msra.mxu0 0
        %860 = vmatprep.subr.bf16.mxu0 0
        %861 = vmatpush1.bf16.msra.mxu0 0
        %862 = vmatprep.subr.bf16.mxu0 0
        %863 = vmatpush1.bf16.msra.mxu0 0
        %864 = vmatprep.subr.bf16.mxu0 0
        %865 = vmatpush1.bf16.msra.mxu0 %v846
        %866 = vmatprep.subr.bf16.mxu0 0
        %867 = vmatpush1.bf16.msra.mxu0 %v845
        %868 = vmatprep.subr.bf16.mxu0 0
        %869 = vmatpush2.bf16.msra.mxu0 0
        %870 = vmatprep.subr.bf16.mxu0 0
        %871 = vmatpush2.bf16.msra.mxu0 0
        %872 = vmatprep.subr.bf16.mxu0 0
        %873 = vmatpush2.bf16.msra.mxu0 0
        %874 = vmatprep.subr.bf16.mxu0 0
        %875 = vmatpush2.bf16.msra.mxu0 0
        %876 = vmatprep.subr.bf16.mxu0 0
        %877 = vmatpush2.bf16.msra.mxu0 0
        %878 = vmatprep.subr.bf16.mxu0 0
        %879 = vmatpush2.bf16.msra.mxu0 0
        %880 = vmatprep.subr.bf16.mxu0 0
        %881 = vmatpush2.bf16.msra.mxu0 0
        %882 = vmatprep.subr.bf16.mxu0 0
        %883 = vmatpush2.bf16.msra.mxu0 0
        %884 = vmatprep.mubr.bf16.mxu0 0
        %885 = vmatmul.mubr.bf16.gmra.mxu0 %v850
        %v886 = vpop.f32.mrf.mxu0
        %v887 = vadd.f32 %v835, %v886
        %v888 = vpop.f32.mrf.mxu0
        %v889 = vpop.f32.mrf.mxu0
        %v890 = vpop.f32.mrf.mxu0
        %891 = vdwg.mxu0
        %v892 = vpack.c.bf16 %v887, %v887
        %v893 = vld [vmem:[#allocation5] sm:$0xf]
        %v894 = vld [vmem:[#allocation5 + $0x4] sm:$0xf]
        %v895 = vld [vmem:[#allocation5 + $0x8] sm:$0xf]
        %v896 = vld [vmem:[#allocation5 + $0xc] sm:$0xf]
        %v897 = vld [vmem:[%s8] sm:$0x1]
        %v899 = vlaneseq
        %v900 = vshrl.u32 %v899, 7
        %v901 = vsub.s32 0, %v900
        %v902 = vrot.slane %v897, %v901
        %v908 = vunpack.c.l.b16 %v893
        %v909 = vunpack.c.l.b16 %v894
        %v910 = vunpack.c.l.b16 %v895
        %v911 = vunpack.c.l.b16 %v896
        %v912 = vpack.c.b16 %v909, %v908
        %v913 = vpack.c.b16 %v911, %v910
        %v917 = vsel %vm742, %v825, 0
        %919 = vmatprep.subr.bf16.mxu0 0
        %920 = vmatpush1.bf16.msra.mxu0 0
        %921 = vmatprep.subr.bf16.mxu0 0
        %922 = vmatpush1.bf16.msra.mxu0 0
        %923 = vmatprep.subr.bf16.mxu0 0
        %924 = vmatpush1.bf16.msra.mxu0 0
        %925 = vmatprep.subr.bf16.mxu0 0
        %926 = vmatpush1.bf16.msra.mxu0 0
        %927 = vmatprep.subr.bf16.mxu0 0
        %928 = vmatpush1.bf16.msra.mxu0 0
        %929 = vmatprep.subr.bf16.mxu0 0
        %930 = vmatpush1.bf16.msra.mxu0 0
        %931 = vmatprep.subr.bf16.mxu0 0
        %932 = vmatpush1.bf16.msra.mxu0 %v913
        %933 = vmatprep.subr.bf16.mxu0 0
        %934 = vmatpush1.bf16.msra.mxu0 %v912
        %935 = vmatprep.subr.bf16.mxu0 0
        %936 = vmatpush2.bf16.msra.mxu0 0
        %937 = vmatprep.subr.bf16.mxu0 0
        %938 = vmatpush2.bf16.msra.mxu0 0
        %939 = vmatprep.subr.bf16.mxu0 0
        %940 = vmatpush2.bf16.msra.mxu0 0
        %941 = vmatprep.subr.bf16.mxu0 0
        %942 = vmatpush2.bf16.msra.mxu0 0
        %943 = vmatprep.subr.bf16.mxu0 0
        %944 = vmatpush2.bf16.msra.mxu0 0
        %945 = vmatprep.subr.bf16.mxu0 0
        %946 = vmatpush2.bf16.msra.mxu0 0
        %947 = vmatprep.subr.bf16.mxu0 0
        %948 = vmatpush2.bf16.msra.mxu0 0
        %949 = vmatprep.subr.bf16.mxu0 0
        %950 = vmatpush2.bf16.msra.mxu0 0
        %951 = vmatprep.mubr.bf16.mxu0 0
        %952 = vmatmul.mubr.bf16.gmra.mxu0 %v917
        %v953 = vpop.f32.mrf.mxu0
        %v954 = vadd.f32 %v902, %v953
        %v955 = vpop.f32.mrf.mxu0
        %v956 = vpop.f32.mrf.mxu0
        %v957 = vadd.f32 %v902, %v956
        %v958 = vpop.f32.mrf.mxu0
        %959 = vdwg.mxu0
        %v960 = vpack.c.bf16 %v957, %v954
        %v961 = vld [vmem:[#allocation7] sm:$0xf]
        %v962 = vld [vmem:[#allocation7 + $0x4] sm:$0xf]
        %v963 = vld [vmem:[#allocation7 + $0x8] sm:$0xf]
        %v964 = vld [vmem:[#allocation7 + $0xc] sm:$0xf]
        %v965 = vld [vmem:[%s10] sm:$0x1]
        %v967 = vlaneseq
        %v968 = vshrl.u32 %v967, 7
        %v969 = vsub.s32 0, %v968
        %v970 = vrot.slane %v965, %v969
        %v976 = vunpack.c.l.b16 %v961
        %v977 = vunpack.c.l.b16 %v962
        %v978 = vunpack.c.l.b16 %v963
        %v979 = vunpack.c.l.b16 %v964
        %v980 = vpack.c.b16 %v977, %v976
        %v981 = vpack.c.b16 %v979, %v978
        %984 = vmatprep.subr.bf16.mxu0 0
        %985 = vmatpush1.bf16.msra.mxu0 0
        %986 = vmatprep.subr.bf16.mxu0 0
        %987 = vmatpush1.bf16.msra.mxu0 0
        %988 = vmatprep.subr.bf16.mxu0 0
        %989 = vmatpush1.bf16.msra.mxu0 0
        %990 = vmatprep.subr.bf16.mxu0 0
        %991 = vmatpush1.bf16.msra.mxu0 0
        %992 = vmatprep.subr.bf16.mxu0 0
        %993 = vmatpush1.bf16.msra.mxu0 0
        %994 = vmatprep.subr.bf16.mxu0 0
        %995 = vmatpush1.bf16.msra.mxu0 0
        %996 = vmatprep.subr.bf16.mxu0 0
        %997 = vmatpush1.bf16.msra.mxu0 %v981
        %998 = vmatprep.subr.bf16.mxu0 0
        %999 = vmatpush1.bf16.msra.mxu0 %v980
        %1000 = vmatprep.subr.bf16.mxu0 0
        %1001 = vmatpush2.bf16.msra.mxu0 0
        %1002 = vmatprep.subr.bf16.mxu0 0
        %1003 = vmatpush2.bf16.msra.mxu0 0
        %1004 = vmatprep.subr.bf16.mxu0 0
        %1005 = vmatpush2.bf16.msra.mxu0 0
        %1006 = vmatprep.subr.bf16.mxu0 0
        %1007 = vmatpush2.bf16.msra.mxu0 0
        %1008 = vmatprep.subr.bf16.mxu0 0
        %1009 = vmatpush2.bf16.msra.mxu0 0
        %1010 = vmatprep.subr.bf16.mxu0 0
        %1011 = vmatpush2.bf16.msra.mxu0 0
        %1012 = vmatprep.subr.bf16.mxu0 0
        %1013 = vmatpush2.bf16.msra.mxu0 0
        %1014 = vmatprep.subr.bf16.mxu0 0
        %1015 = vmatpush2.bf16.msra.mxu0 0
        %1016 = vmatprep.mubr.bf16.mxu0 0
        %1017 = vmatmul.mubr.bf16.gmra.mxu0 %v917
        %v1018 = vpop.f32.mrf.mxu0
        %v1019 = vadd.f32 %v970, %v1018
        %v1020 = vpop.f32.mrf.mxu0
        %v1021 = vpop.f32.mrf.mxu0
        %v1022 = vadd.f32 %v970, %v1021
        %v1023 = vpop.f32.mrf.mxu0
        %1024 = vdwg.mxu0
        %v1025 = vpack.c.bf16 %v1022, %v1019
        %v1026 = vld [vmem:[%s737] sm:$0x1]
        %vm1027 = vcmp.eq.f32.partialorder %v1026, 0.0
        %vm1028 = vcmask 64512
        %v1030 = vsel %vm1028, %v892, 0
        %v1033 = vsel %vm1028, %v960, 0
        %1035 = vmatprep.subr.bf16.mxu0 0
        %1036 = vmatpush1.bf16.xpose.msra.mxu0 0
        %1037 = vmatprep.subr.bf16.mxu0 0
        %1038 = vmatpush1.bf16.xpose.msra.mxu0 0
        %1039 = vmatprep.subr.bf16.mxu0 0
        %1040 = vmatpush1.bf16.xpose.msra.mxu0 0
        %1041 = vmatprep.subr.bf16.mxu0 0
        %1042 = vmatpush1.bf16.xpose.msra.mxu0 0
        %1043 = vmatprep.subr.bf16.mxu0 0
        %1044 = vmatpush1.bf16.xpose.msra.mxu0 0
        %1045 = vmatprep.subr.bf16.mxu0 0
        %1046 = vmatpush1.bf16.xpose.msra.mxu0 0
        %1047 = vmatprep.subr.bf16.mxu0 0
        %1048 = vmatpush1.bf16.xpose.msra.mxu0 0
        %1049 = vmatprep.subr.bf16.mxu0 0
        %1050 = vmatpush1.bf16.xpose.msra.mxu0 %v1033
        %1051 = vmatprep.subr.bf16.mxu0 0
        %1052 = vmatpush2.bf16.xpose.msra.mxu0 0
        %1053 = vmatprep.subr.bf16.mxu0 0
        %1054 = vmatpush2.bf16.xpose.msra.mxu0 0
        %1055 = vmatprep.subr.bf16.mxu0 0
        %1056 = vmatpush2.bf16.xpose.msra.mxu0 0
        %1057 = vmatprep.subr.bf16.mxu0 0
        %1058 = vmatpush2.bf16.xpose.msra.mxu0 0
        %1059 = vmatprep.subr.bf16.mxu0 0
        %1060 = vmatpush2.bf16.xpose.msra.mxu0 0
        %1061 = vmatprep.subr.bf16.mxu0 0
        %1062 = vmatpush2.bf16.xpose.msra.mxu0 0
        %1063 = vmatprep.subr.bf16.mxu0 0
        %1064 = vmatpush2.bf16.xpose.msra.mxu0 0
        %1065 = vmatprep.subr.bf16.mxu0 0
        %1066 = vmatpush2.bf16.xpose.msra.mxu0 0
        %1067 = vmatprep.mubr.bf16.mxu0 0
        %1068 = vmatmul.mubr.bf16.gmra.mxu0 %v1030
        %v1069 = vpop.f32.mrf.mxu0
        %v1070 = vadd.f32 0.0, %v1069
        %v1071 = vpop.f32.mrf.mxu0
        %v1072 = vpop.f32.mrf.mxu0
        %v1073 = vpop.f32.mrf.mxu0
        %1074 = vdwg.mxu0
        %v1075 = vsel %vm1027, 1, 0
        %v1076 = vlaneseq
        %v1077 = vshrl.u32 %v1076, 7
        %v1078 = vsub.s32 0, %v1077
        %v1079 = vrot.slane %v1075, %v1078
        %vm1080 = vcmp.eq.s32.totalorder %v1079, 1
        %v1081 = vsel %vm1080, -1e+09, %v1070
        %vm1082 = vcmask 130048
        %v1083 = vsel %vm1082, %v1081, -inf
        %1084 = vmax.xlane.f32.xlu0 %v1083
        %v1085 = vpop.xlane.xlu0 %1084
        %v1086 = vsub.f32 %v1081, %v1085
        %v1087 = vmul.f32 %v1086, 1.442695
        %v1088 = vpow.pop %v1087
        %v1089 = vsel %vm1082, %v1088, 0.0
        %1090 = vadd.xlane.f32.xlu0 %v1089
        %v1091 = vpop.xlane.xlu0 %1090
        %v1092 = vrcp.pop %v1091
        %v1093 = vmul.f32 %v1088, %v1092
        %v1094 = vpack.c.bf16 %v1093, %v1093
        %v1096 = vsel %vm1082, %v1094, 0
        %1098 = vmatprep.subr.bf16.mxu0 0
        %1099 = vmatpush1.bf16.msra.mxu0 0
        %1100 = vmatprep.subr.bf16.mxu0 0
        %1101 = vmatpush1.bf16.msra.mxu0 0
        %1102 = vmatprep.subr.bf16.mxu0 0
        %1103 = vmatpush1.bf16.msra.mxu0 0
        %1104 = vmatprep.subr.bf16.mxu0 0
        %1105 = vmatpush1.bf16.msra.mxu0 0
        %1106 = vmatprep.subr.bf16.mxu0 0
        %1107 = vmatpush1.bf16.msra.mxu0 0
        %1108 = vmatprep.subr.bf16.mxu0 0
        %1109 = vmatpush1.bf16.msra.mxu0 0
        %1110 = vmatprep.subr.bf16.mxu0 0
        %1111 = vmatpush1.bf16.msra.mxu0 0
        %1112 = vmatprep.subr.bf16.mxu0 0
        %1113 = vmatpush1.bf16.msra.mxu0 %v1025
        %1114 = vmatprep.subr.bf16.mxu0 0
        %1115 = vmatpush2.bf16.msra.mxu0 0
        %1116 = vmatprep.subr.bf16.mxu0 0
        %1117 = vmatpush2.bf16.msra.mxu0 0
        %1118 = vmatprep.subr.bf16.mxu0 0
        %1119 = vmatpush2.bf16.msra.mxu0 0
        %1120 = vmatprep.subr.bf16.mxu0 0
        %1121 = vmatpush2.bf16.msra.mxu0 0
        %1122 = vmatprep.subr.bf16.mxu0 0
        %1123 = vmatpush2.bf16.msra.mxu0 0
        %1124 = vmatprep.subr.bf16.mxu0 0
        %1125 = vmatpush2.bf16.msra.mxu0 0
        %1126 = vmatprep.subr.bf16.mxu0 0
        %1127 = vmatpush2.bf16.msra.mxu0 0
        %1128 = vmatprep.subr.bf16.mxu0 0
        %1129 = vmatpush2.bf16.msra.mxu0 0
        %1130 = vmatprep.mubr.bf16.mxu0 0
        %1131 = vmatmul.mubr.bf16.gmra.mxu0 %v1096
        %v1132 = vpop.f32.mrf.mxu0
        %v1133 = vadd.f32 0.0, %v1132
        %v1134 = vpop.f32.mrf.mxu0
        %v1135 = vpop.f32.mrf.mxu0
        %v1136 = vpop.f32.mrf.mxu0
        %1137 = vdwg.mxu0
        %v1138 = vpack.c.bf16 %v1133, %v1133
        %1140 = vrot.lane.b32.xlu0 %v892, 120
        %v1141 = vpop.permute.xlu0 %1140
        %1143 = vrot.lane.b32.xlu0 %v960, 120
        %v1144 = vpop.permute.xlu0 %1143
        %v1146 = vsel %vm1028, %v1141, 0
        %v1149 = vsel %vm1028, %v1144, 0
        %1151 = vmatprep.subr.bf16.mxu0 0
        %1152 = vmatpush1.bf16.xpose.msra.mxu0 0
        %1153 = vmatprep.subr.bf16.mxu0 0
        %1154 = vmatpush1.bf16.xpose.msra.mxu0 0
        %1155 = vmatprep.subr.bf16.mxu0 0
        %1156 = vmatpush1.bf16.xpose.msra.mxu0 0
        %1157 = vmatprep.subr.bf16.mxu0 0
        %1158 = vmatpush1.bf16.xpose.msra.mxu0 0
        %1159 = vmatprep.subr.bf16.mxu0 0
        %1160 = vmatpush1.bf16.xpose.msra.mxu0 0
        %1161 = vmatprep.subr.bf16.mxu0 0
        %1162 = vmatpush1.bf16.xpose.msra.mxu0 0
        %1163 = vmatprep.subr.bf16.mxu0 0
        %1164 = vmatpush1.bf16.xpose.msra.mxu0 0
        %1165 = vmatprep.subr.bf16.mxu0 0
        %1166 = vmatpush1.bf16.xpose.msra.mxu0 %v1149
        %1167 = vmatprep.subr.bf16.mxu0 0
        %1168 = vmatpush2.bf16.xpose.msra.mxu0 0
        %1169 = vmatprep.subr.bf16.mxu0 0
        %1170 = vmatpush2.bf16.xpose.msra.mxu0 0
        %1171 = vmatprep.subr.bf16.mxu0 0
        %1172 = vmatpush2.bf16.xpose.msra.mxu0 0
        %1173 = vmatprep.subr.bf16.mxu0 0
        %1174 = vmatpush2.bf16.xpose.msra.mxu0 0
        %1175 = vmatprep.subr.bf16.mxu0 0
        %1176 = vmatpush2.bf16.xpose.msra.mxu0 0
        %1177 = vmatprep.subr.bf16.mxu0 0
        %1178 = vmatpush2.bf16.xpose.msra.mxu0 0
        %1179 = vmatprep.subr.bf16.mxu0 0
        %1180 = vmatpush2.bf16.xpose.msra.mxu0 0
        %1181 = vmatprep.subr.bf16.mxu0 0
        %1182 = vmatpush2.bf16.xpose.msra.mxu0 0
        %1183 = vmatprep.mubr.bf16.mxu0 0
        %1184 = vmatmul.mubr.bf16.gmra.mxu0 %v1146
        %v1185 = vpop.f32.mrf.mxu0
        %v1186 = vadd.f32 0.0, %v1185
        %v1187 = vpop.f32.mrf.mxu0
        %v1188 = vpop.f32.mrf.mxu0
        %v1189 = vpop.f32.mrf.mxu0
        %1190 = vdwg.mxu0
        %v1191 = vsel %vm1080, -1e+09, %v1186
        %v1192 = vsel %vm1082, %v1191, -inf
        %1193 = vmax.xlane.f32.xlu0 %v1192
        %v1194 = vpop.xlane.xlu0 %1193
        %v1195 = vsub.f32 %v1191, %v1194
        %v1196 = vmul.f32 %v1195, 1.442695
        %v1197 = vpow.pop %v1196
        %v1198 = vsel %vm1082, %v1197, 0.0
        %1199 = vadd.xlane.f32.xlu0 %v1198
        %v1200 = vpop.xlane.xlu0 %1199
        %v1201 = vrcp.pop %v1200
        %v1202 = vmul.f32 %v1197, %v1201
        %v1203 = vpack.c.bf16 %v1202, %v1202
        %1205 = vrot.lane.b32.xlu0 %v1025, 120
        %v1206 = vpop.permute.xlu0 %1205
        %v1209 = vsel %vm1082, %v1203, 0
        %1211 = vmatprep.subr.bf16.mxu0 0
        %1212 = vmatpush1.bf16.msra.mxu0 0
        %1213 = vmatprep.subr.bf16.mxu0 0
        %1214 = vmatpush1.bf16.msra.mxu0 0
        %1215 = vmatprep.subr.bf16.mxu0 0
        %1216 = vmatpush1.bf16.msra.mxu0 0
        %1217 = vmatprep.subr.bf16.mxu0 0
        %1218 = vmatpush1.bf16.msra.mxu0 0
        %1219 = vmatprep.subr.bf16.mxu0 0
        %1220 = vmatpush1.bf16.msra.mxu0 0
        %1221 = vmatprep.subr.bf16.mxu0 0
        %1222 = vmatpush1.bf16.msra.mxu0 0
        %1223 = vmatprep.subr.bf16.mxu0 0
        %1224 = vmatpush1.bf16.msra.mxu0 0
        %1225 = vmatprep.subr.bf16.mxu0 0
        %1226 = vmatpush1.bf16.msra.mxu0 %v1206
        %1227 = vmatprep.subr.bf16.mxu0 0
        %1228 = vmatpush2.bf16.msra.mxu0 0
        %1229 = vmatprep.subr.bf16.mxu0 0
        %1230 = vmatpush2.bf16.msra.mxu0 0
        %1231 = vmatprep.subr.bf16.mxu0 0
        %1232 = vmatpush2.bf16.msra.mxu0 0
        %1233 = vmatprep.subr.bf16.mxu0 0
        %1234 = vmatpush2.bf16.msra.mxu0 0
        %1235 = vmatprep.subr.bf16.mxu0 0
        %1236 = vmatpush2.bf16.msra.mxu0 0
        %1237 = vmatprep.subr.bf16.mxu0 0
        %1238 = vmatpush2.bf16.msra.mxu0 0
        %1239 = vmatprep.subr.bf16.mxu0 0
        %1240 = vmatpush2.bf16.msra.mxu0 0
        %1241 = vmatprep.subr.bf16.mxu0 0
        %1242 = vmatpush2.bf16.msra.mxu0 0
        %1243 = vmatprep.mubr.bf16.mxu0 0
        %1244 = vmatmul.mubr.bf16.gmra.mxu0 %v1209
        %v1245 = vpop.f32.mrf.mxu0
        %v1246 = vadd.f32 0.0, %v1245
        %v1247 = vpop.f32.mrf.mxu0
        %v1248 = vpop.f32.mrf.mxu0
        %v1249 = vpop.f32.mrf.mxu0
        %1250 = vdwg.mxu0
        %v1251 = vpack.c.bf16 %v1246, %v1246
        %1252 = vrot.lane.b32.xlu0 %v892, 112
        %v1253 = vpop.permute.xlu0 %1252
        %1254 = vrot.lane.b32.xlu0 %v960, 112
        %v1255 = vpop.permute.xlu0 %1254
        %v1257 = vsel %vm1028, %v1253, 0
        %v1260 = vsel %vm1028, %v1255, 0
        %1262 = vmatprep.subr.bf16.mxu0 0
        %1263 = vmatpush1.bf16.xpose.msra.mxu0 0
        %1264 = vmatprep.subr.bf16.mxu0 0
        %1265 = vmatpush1.bf16.xpose.msra.mxu0 0
        %1266 = vmatprep.subr.bf16.mxu0 0
        %1267 = vmatpush1.bf16.xpose.msra.mxu0 0
        %1268 = vmatprep.subr.bf16.mxu0 0
        %1269 = vmatpush1.bf16.xpose.msra.mxu0 0
        %1270 = vmatprep.subr.bf16.mxu0 0
        %1271 = vmatpush1.bf16.xpose.msra.mxu0 0
        %1272 = vmatprep.subr.bf16.mxu0 0
        %1273 = vmatpush1.bf16.xpose.msra.mxu0 0
        %1274 = vmatprep.subr.bf16.mxu0 0
        %1275 = vmatpush1.bf16.xpose.msra.mxu0 0
        %1276 = vmatprep.subr.bf16.mxu0 0
        %1277 = vmatpush1.bf16.xpose.msra.mxu0 %v1260
        %1278 = vmatprep.subr.bf16.mxu0 0
        %1279 = vmatpush2.bf16.xpose.msra.mxu0 0
        %1280 = vmatprep.subr.bf16.mxu0 0
        %1281 = vmatpush2.bf16.xpose.msra.mxu0 0
        %1282 = vmatprep.subr.bf16.mxu0 0
        %1283 = vmatpush2.bf16.xpose.msra.mxu0 0
        %1284 = vmatprep.subr.bf16.mxu0 0
        %1285 = vmatpush2.bf16.xpose.msra.mxu0 0
        %1286 = vmatprep.subr.bf16.mxu0 0
        %1287 = vmatpush2.bf16.xpose.msra.mxu0 0
        %1288 = vmatprep.subr.bf16.mxu0 0
        %1289 = vmatpush2.bf16.xpose.msra.mxu0 0
        %1290 = vmatprep.subr.bf16.mxu0 0
        %1291 = vmatpush2.bf16.xpose.msra.mxu0 0
        %1292 = vmatprep.subr.bf16.mxu0 0
        %1293 = vmatpush2.bf16.xpose.msra.mxu0 0
        %1294 = vmatprep.mubr.bf16.mxu0 0
        %1295 = vmatmul.mubr.bf16.gmra.mxu0 %v1257
        %v1296 = vpop.f32.mrf.mxu0
        %v1297 = vadd.f32 0.0, %v1296
        %v1298 = vpop.f32.mrf.mxu0
        %v1299 = vpop.f32.mrf.mxu0
        %v1300 = vpop.f32.mrf.mxu0
        %1301 = vdwg.mxu0
        %v1302 = vsel %vm1080, -1e+09, %v1297
        %v1303 = vsel %vm1082, %v1302, -inf
        %1304 = vmax.xlane.f32.xlu0 %v1303
        %v1305 = vpop.xlane.xlu0 %1304
        %v1306 = vsub.f32 %v1302, %v1305
        %v1307 = vmul.f32 %v1306, 1.442695
        %v1308 = vpow.pop %v1307
        %v1309 = vsel %vm1082, %v1308, 0.0
        %1310 = vadd.xlane.f32.xlu0 %v1309
        %v1311 = vpop.xlane.xlu0 %1310
        %v1312 = vrcp.pop %v1311
        %v1313 = vmul.f32 %v1308, %v1312
        %v1314 = vpack.c.bf16 %v1313, %v1313
        %1315 = vrot.lane.b32.xlu0 %v1025, 112
        %v1316 = vpop.permute.xlu0 %1315
        %v1319 = vsel %vm1082, %v1314, 0
        %1321 = vmatprep.subr.bf16.mxu0 0
        %1322 = vmatpush1.bf16.msra.mxu0 0
        %1323 = vmatprep.subr.bf16.mxu0 0
        %1324 = vmatpush1.bf16.msra.mxu0 0
        %1325 = vmatprep.subr.bf16.mxu0 0
        %1326 = vmatpush1.bf16.msra.mxu0 0
        %1327 = vmatprep.subr.bf16.mxu0 0
        %1328 = vmatpush1.bf16.msra.mxu0 0
        %1329 = vmatprep.subr.bf16.mxu0 0
        %1330 = vmatpush1.bf16.msra.mxu0 0
        %1331 = vmatprep.subr.bf16.mxu0 0
        %1332 = vmatpush1.bf16.msra.mxu0 0
        %1333 = vmatprep.subr.bf16.mxu0 0
        %1334 = vmatpush1.bf16.msra.mxu0 0
        %1335 = vmatprep.subr.bf16.mxu0 0
        %1336 = vmatpush1.bf16.msra.mxu0 %v1316
        %1337 = vmatprep.subr.bf16.mxu0 0
        %1338 = vmatpush2.bf16.msra.mxu0 0
        %1339 = vmatprep.subr.bf16.mxu0 0
        %1340 = vmatpush2.bf16.msra.mxu0 0
        %1341 = vmatprep.subr.bf16.mxu0 0
        %1342 = vmatpush2.bf16.msra.mxu0 0
        %1343 = vmatprep.subr.bf16.mxu0 0
        %1344 = vmatpush2.bf16.msra.mxu0 0
        %1345 = vmatprep.subr.bf16.mxu0 0
        %1346 = vmatpush2.bf16.msra.mxu0 0
        %1347 = vmatprep.subr.bf16.mxu0 0
        %1348 = vmatpush2.bf16.msra.mxu0 0
        %1349 = vmatprep.subr.bf16.mxu0 0
        %1350 = vmatpush2.bf16.msra.mxu0 0
        %1351 = vmatprep.subr.bf16.mxu0 0
        %1352 = vmatpush2.bf16.msra.mxu0 0
        %1353 = vmatprep.mubr.bf16.mxu0 0
        %1354 = vmatmul.mubr.bf16.gmra.mxu0 %v1319
        %v1355 = vpop.f32.mrf.mxu0
        %v1356 = vadd.f32 0.0, %v1355
        %v1357 = vpop.f32.mrf.mxu0
        %v1358 = vpop.f32.mrf.mxu0
        %v1359 = vpop.f32.mrf.mxu0
        %1360 = vdwg.mxu0
        %v1361 = vpack.c.bf16 %v1356, %v1356
        %1362 = vrot.lane.b32.xlu0 %v892, 104
        %v1363 = vpop.permute.xlu0 %1362
        %1364 = vrot.lane.b32.xlu0 %v960, 104
        %v1365 = vpop.permute.xlu0 %1364
        %v1367 = vsel %vm1028, %v1363, 0
        %v1370 = vsel %vm1028, %v1365, 0
        %1372 = vmatprep.subr.bf16.mxu0 0
        %1373 = vmatpush1.bf16.xpose.msra.mxu0 0
        %1374 = vmatprep.subr.bf16.mxu0 0
        %1375 = vmatpush1.bf16.xpose.msra.mxu0 0
        %1376 = vmatprep.subr.bf16.mxu0 0
        %1377 = vmatpush1.bf16.xpose.msra.mxu0 0
        %1378 = vmatprep.subr.bf16.mxu0 0
        %1379 = vmatpush1.bf16.xpose.msra.mxu0 0
        %1380 = vmatprep.subr.bf16.mxu0 0
        %1381 = vmatpush1.bf16.xpose.msra.mxu0 0
        %1382 = vmatprep.subr.bf16.mxu0 0
        %1383 = vmatpush1.bf16.xpose.msra.mxu0 0
        %1384 = vmatprep.subr.bf16.mxu0 0
        %1385 = vmatpush1.bf16.xpose.msra.mxu0 0
        %1386 = vmatprep.subr.bf16.mxu0 0
        %1387 = vmatpush1.bf16.xpose.msra.mxu0 %v1370
        %1388 = vmatprep.subr.bf16.mxu0 0
        %1389 = vmatpush2.bf16.xpose.msra.mxu0 0
        %1390 = vmatprep.subr.bf16.mxu0 0
        %1391 = vmatpush2.bf16.xpose.msra.mxu0 0
        %1392 = vmatprep.subr.bf16.mxu0 0
        %1393 = vmatpush2.bf16.xpose.msra.mxu0 0
        %1394 = vmatprep.subr.bf16.mxu0 0
        %1395 = vmatpush2.bf16.xpose.msra.mxu0 0
        %1396 = vmatprep.subr.bf16.mxu0 0
        %1397 = vmatpush2.bf16.xpose.msra.mxu0 0
        %1398 = vmatprep.subr.bf16.mxu0 0
        %1399 = vmatpush2.bf16.xpose.msra.mxu0 0
        %1400 = vmatprep.subr.bf16.mxu0 0
        %1401 = vmatpush2.bf16.xpose.msra.mxu0 0
        %1402 = vmatprep.subr.bf16.mxu0 0
        %1403 = vmatpush2.bf16.xpose.msra.mxu0 0
        %1404 = vmatprep.mubr.bf16.mxu0 0
        %1405 = vmatmul.mubr.bf16.gmra.mxu0 %v1367
        %v1406 = vpop.f32.mrf.mxu0
        %v1407 = vadd.f32 0.0, %v1406
        %v1408 = vpop.f32.mrf.mxu0
        %v1409 = vpop.f32.mrf.mxu0
        %v1410 = vpop.f32.mrf.mxu0
        %1411 = vdwg.mxu0
        %v1412 = vsel %vm1080, -1e+09, %v1407
        %v1413 = vsel %vm1082, %v1412, -inf
        %1414 = vmax.xlane.f32.xlu0 %v1413
        %v1415 = vpop.xlane.xlu0 %1414
        %v1416 = vsub.f32 %v1412, %v1415
        %v1417 = vmul.f32 %v1416, 1.442695
        %v1418 = vpow.pop %v1417
        %v1419 = vsel %vm1082, %v1418, 0.0
        %1420 = vadd.xlane.f32.xlu0 %v1419
        %v1421 = vpop.xlane.xlu0 %1420
        %v1422 = vrcp.pop %v1421
        %v1423 = vmul.f32 %v1418, %v1422
        %v1424 = vpack.c.bf16 %v1423, %v1423
        %1425 = vrot.lane.b32.xlu0 %v1025, 104
        %v1426 = vpop.permute.xlu0 %1425
        %v1429 = vsel %vm1082, %v1424, 0
        %1431 = vmatprep.subr.bf16.mxu0 0
        %1432 = vmatpush1.bf16.msra.mxu0 0
        %1433 = vmatprep.subr.bf16.mxu0 0
        %1434 = vmatpush1.bf16.msra.mxu0 0
        %1435 = vmatprep.subr.bf16.mxu0 0
        %1436 = vmatpush1.bf16.msra.mxu0 0
        %1437 = vmatprep.subr.bf16.mxu0 0
        %1438 = vmatpush1.bf16.msra.mxu0 0
        %1439 = vmatprep.subr.bf16.mxu0 0
        %1440 = vmatpush1.bf16.msra.mxu0 0
        %1441 = vmatprep.subr.bf16.mxu0 0
        %1442 = vmatpush1.bf16.msra.mxu0 0
        %1443 = vmatprep.subr.bf16.mxu0 0
        %1444 = vmatpush1.bf16.msra.mxu0 0
        %1445 = vmatprep.subr.bf16.mxu0 0
        %1446 = vmatpush1.bf16.msra.mxu0 %v1426
        %1447 = vmatprep.subr.bf16.mxu0 0
        %1448 = vmatpush2.bf16.msra.mxu0 0
        %1449 = vmatprep.subr.bf16.mxu0 0
        %1450 = vmatpush2.bf16.msra.mxu0 0
        %1451 = vmatprep.subr.bf16.mxu0 0
        %1452 = vmatpush2.bf16.msra.mxu0 0
        %1453 = vmatprep.subr.bf16.mxu0 0
        %1454 = vmatpush2.bf16.msra.mxu0 0
        %1455 = vmatprep.subr.bf16.mxu0 0
        %1456 = vmatpush2.bf16.msra.mxu0 0
        %1457 = vmatprep.subr.bf16.mxu0 0
        %1458 = vmatpush2.bf16.msra.mxu0 0
        %1459 = vmatprep.subr.bf16.mxu0 0
        %1460 = vmatpush2.bf16.msra.mxu0 0
        %1461 = vmatprep.subr.bf16.mxu0 0
        %1462 = vmatpush2.bf16.msra.mxu0 0
        %1463 = vmatprep.mubr.bf16.mxu0 0
        %1464 = vmatmul.mubr.bf16.gmra.mxu0 %v1429
        %v1465 = vpop.f32.mrf.mxu0
        %v1466 = vadd.f32 0.0, %v1465
        %v1467 = vpop.f32.mrf.mxu0
        %v1468 = vpop.f32.mrf.mxu0
        %v1469 = vpop.f32.mrf.mxu0
        %1470 = vdwg.mxu0
        %v1471 = vpack.c.bf16 %v1466, %v1466
        %1473 = vrot.lane.b32.xlu0 %v1251, 8
        %v1474 = vpop.permute.xlu0 %1473
        %1476 = vrot.lane.b32.xlu0 %v1361, 16
        %v1477 = vpop.permute.xlu0 %1476
        %1479 = vrot.lane.b32.xlu0 %v1471, 24
        %v1480 = vpop.permute.xlu0 %1479
        %v1483 = vsel %vm1028, %v1138, %v1474
        %v1485 = vsel %vm1082, %v1483, %v1477
        %vm1486 = vcmask 195584
        %v1488 = vsel %vm1486, %v1485, %v1480
        %v1489 = vld [vmem:[#allocation8] sm:$0xf]
        %v1490 = vld [vmem:[#allocation8 + $0x4] sm:$0xf]
        %v1491 = vld [vmem:[#allocation8 + $0x8] sm:$0xf]
        %v1492 = vld [vmem:[#allocation8 + $0xc] sm:$0xf]
        %v1493 = vld [vmem:[%s12] sm:$0x1]
        %v1495 = vlaneseq
        %v1496 = vshrl.u32 %v1495, 7
        %v1497 = vsub.s32 0, %v1496
        %v1498 = vrot.slane %v1493, %v1497
        %v1504 = vunpack.c.l.b16 %v1489
        %v1505 = vunpack.c.l.b16 %v1490
        %v1506 = vunpack.c.l.b16 %v1491
        %v1507 = vunpack.c.l.b16 %v1492
        %v1508 = vpack.c.b16 %v1505, %v1504
        %v1509 = vpack.c.b16 %v1507, %v1506
        %v1512 = vsel %vm742, %v1488, 0
        %1514 = vmatprep.subr.bf16.mxu0 0
        %1515 = vmatpush1.bf16.msra.mxu0 0
        %1516 = vmatprep.subr.bf16.mxu0 0
        %1517 = vmatpush1.bf16.msra.mxu0 0
        %1518 = vmatprep.subr.bf16.mxu0 0
        %1519 = vmatpush1.bf16.msra.mxu0 0
        %1520 = vmatprep.subr.bf16.mxu0 0
        %1521 = vmatpush1.bf16.msra.mxu0 0
        %1522 = vmatprep.subr.bf16.mxu0 0
        %1523 = vmatpush1.bf16.msra.mxu0 0
        %1524 = vmatprep.subr.bf16.mxu0 0
        %1525 = vmatpush1.bf16.msra.mxu0 0
        %1526 = vmatprep.subr.bf16.mxu0 0
        %1527 = vmatpush1.bf16.msra.mxu0 %v1509
        %1528 = vmatprep.subr.bf16.mxu0 0
        %1529 = vmatpush1.bf16.msra.mxu0 %v1508
        %1530 = vmatprep.subr.bf16.mxu0 0
        %1531 = vmatpush2.bf16.msra.mxu0 0
        %1532 = vmatprep.subr.bf16.mxu0 0
        %1533 = vmatpush2.bf16.msra.mxu0 0
        %1534 = vmatprep.subr.bf16.mxu0 0
        %1535 = vmatpush2.bf16.msra.mxu0 0
        %1536 = vmatprep.subr.bf16.mxu0 0
        %1537 = vmatpush2.bf16.msra.mxu0 0
        %1538 = vmatprep.subr.bf16.mxu0 0
        %1539 = vmatpush2.bf16.msra.mxu0 0
        %1540 = vmatprep.subr.bf16.mxu0 0
        %1541 = vmatpush2.bf16.msra.mxu0 0
        %1542 = vmatprep.subr.bf16.mxu0 0
        %1543 = vmatpush2.bf16.msra.mxu0 0
        %1544 = vmatprep.subr.bf16.mxu0 0
        %1545 = vmatpush2.bf16.msra.mxu0 0
        %1546 = vmatprep.mubr.bf16.mxu0 0
        %1547 = vmatmul.mubr.bf16.gmra.mxu0 %v1512
        %v1548 = vpop.f32.mrf.mxu0
        %v1549 = vadd.f32 %v1498, %v1548
        %v1550 = vpop.f32.mrf.mxu0
        %v1551 = vpop.f32.mrf.mxu0
        %v1552 = vpop.f32.mrf.mxu0
        %1553 = vdwg.mxu0
        %v1554 = vadd.f32 %v1549, %v1549
        %v1555 = vsel %vm742, %v1554, 0.0
        %1556 = vadd.xlane.f32.xlu0 %v1555
        %v1557 = vpop.xlane.xlu0 %1556
        %v1558 = vmul.f32 %v1557, %v746
        %v1559 = vsub.f32 %v1554, %v1558
        %v1560 = vmul.f32 %v1559, %v1559
        %v1561 = vsel %vm742, %v1560, 0.0
        %1562 = vadd.xlane.f32.xlu0 %v1561
        %v1563 = vpop.xlane.xlu0 %1562
        %v1564 = vmul.f32 %v1563, 0.032258064
        %v1565 = vld [vmem:[%s13] sm:$0x1]
        %v1567 = vlaneseq
        %v1568 = vshrl.u32 %v1567, 7
        %v1569 = vsub.s32 0, %v1568
        %v1570 = vrot.slane %v1565, %v1569
        %v1572 = vmul.f32 %v1570, %v1559
        %v1573 = vrsqrt.pop %v1564
        %v1574 = vmul.f32 %v1564, %v1573
        %vm1575 = vcmp.eq.f32.partialorder %v1564, inf
        %v1576 = vsel %vm1575, %v1564, %v1574
        %vm1577 = vcmp.eq.f32.partialorder %v1564, 0.0
        %v1578 = vand.u32 %v1564, 2147483648
        %v1579 = vsel %vm1577, %v1578, %v1576
        %v1580 = vadd.f32 %v1579, 1e-06
        %v1581 = vrcp.pop %v1580
        %v1582 = vmul.f32 %v1572, %v1581
        %v1583 = vld [vmem:[%s14] sm:$0x1]
        %v1585 = vlaneseq
        %v1586 = vshrl.u32 %v1585, 7
        %v1587 = vsub.s32 0, %v1586
        %v1588 = vrot.slane %v1583, %v1587
        %v1590 = vadd.f32 %v1582, %v1588
        %v1591 = vpack.c.bf16 %v1590, %v1590
        %v1592 = vld [vmem:[#allocation10] sm:$0xf]
        %v1593 = vld [vmem:[#allocation10 + $0x4] sm:$0xf]
        %v1594 = vld [vmem:[#allocation10 + $0x8] sm:$0xf]
        %v1595 = vld [vmem:[#allocation10 + $0xc] sm:$0xf]
        %v1596 = vld [vmem:[%s16] sm:$0x1]
        %v1598 = vlaneseq
        %v1599 = vshrl.u32 %v1598, 7
        %v1600 = vsub.s32 0, %v1599
        %v1601 = vrot.slane %v1596, %v1600
        %v1607 = vunpack.c.l.b16 %v1592
        %v1608 = vunpack.c.l.b16 %v1593
        %v1609 = vunpack.c.l.b16 %v1594
        %v1610 = vunpack.c.l.b16 %v1595
        %v1611 = vpack.c.b16 %v1608, %v1607
        %v1612 = vpack.c.b16 %v1610, %v1609
        %v1616 = vsel %vm742, %v1591, 0
        %1618 = vmatprep.subr.bf16.mxu0 0
        %1619 = vmatpush1.bf16.msra.mxu0 0
        %1620 = vmatprep.subr.bf16.mxu0 0
        %1621 = vmatpush1.bf16.msra.mxu0 0
        %1622 = vmatprep.subr.bf16.mxu0 0
        %1623 = vmatpush1.bf16.msra.mxu0 0
        %1624 = vmatprep.subr.bf16.mxu0 0
        %1625 = vmatpush1.bf16.msra.mxu0 0
        %1626 = vmatprep.subr.bf16.mxu0 0
        %1627 = vmatpush1.bf16.msra.mxu0 0
        %1628 = vmatprep.subr.bf16.mxu0 0
        %1629 = vmatpush1.bf16.msra.mxu0 0
        %1630 = vmatprep.subr.bf16.mxu0 0
        %1631 = vmatpush1.bf16.msra.mxu0 %v1612
        %1632 = vmatprep.subr.bf16.mxu0 0
        %1633 = vmatpush1.bf16.msra.mxu0 %v1611
        %1634 = vmatprep.subr.bf16.mxu0 0
        %1635 = vmatpush2.bf16.msra.mxu0 0
        %1636 = vmatprep.subr.bf16.mxu0 0
        %1637 = vmatpush2.bf16.msra.mxu0 0
        %1638 = vmatprep.subr.bf16.mxu0 0
        %1639 = vmatpush2.bf16.msra.mxu0 0
        %1640 = vmatprep.subr.bf16.mxu0 0
        %1641 = vmatpush2.bf16.msra.mxu0 0
        %1642 = vmatprep.subr.bf16.mxu0 0
        %1643 = vmatpush2.bf16.msra.mxu0 0
        %1644 = vmatprep.subr.bf16.mxu0 0
        %1645 = vmatpush2.bf16.msra.mxu0 0
        %1646 = vmatprep.subr.bf16.mxu0 0
        %1647 = vmatpush2.bf16.msra.mxu0 0
        %1648 = vmatprep.subr.bf16.mxu0 0
        %1649 = vmatpush2.bf16.msra.mxu0 0
        %1650 = vmatprep.mubr.bf16.mxu0 0
        %1651 = vmatmul.mubr.bf16.gmra.mxu0 %v1616
        %v1652 = vpop.f32.mrf.mxu0
        %v1653 = vadd.f32 %v1601, %v1652
        %v1654 = vpop.f32.mrf.mxu0
        %v1655 = vpop.f32.mrf.mxu0
        %v1656 = vpop.f32.mrf.mxu0
        %1657 = vdwg.mxu0
        %v1658 = vmax.f32 %v1653, 0.0
        %v1659 = vpack.c.bf16 %v1658, %v1658
        %v1660 = vld [vmem:[%s17] sm:$0xf]
        %v1661 = vld [vmem:[%s17 + $0x4] sm:$0xf]
        %v1662 = vld [vmem:[%s17 + $0x8] sm:$0xf]
        %v1663 = vld [vmem:[%s17 + $0xc] sm:$0xf]
        %v1664 = vld [vmem:[%s17 + $0x10] sm:$0xf]
        %v1665 = vld [vmem:[%s17 + $0x14] sm:$0xf]
        %v1666 = vld [vmem:[%s17 + $0x18] sm:$0xf]
        %v1667 = vld [vmem:[%s17 + $0x1c] sm:$0xf]
        %v1668 = vld [vmem:[%s18] sm:$0x1]
        %v1670 = vlaneseq
        %v1671 = vshrl.u32 %v1670, 7
        %v1672 = vsub.s32 0, %v1671
        %v1673 = vrot.slane %v1668, %v1672
        %v1683 = vunpack.c.l.b16 %v1660
        %v1684 = vunpack.c.l.b16 %v1661
        %v1685 = vunpack.c.l.b16 %v1662
        %v1686 = vunpack.c.l.b16 %v1663
        %v1687 = vunpack.c.l.b16 %v1664
        %v1688 = vunpack.c.l.b16 %v1665
        %v1689 = vunpack.c.l.b16 %v1666
        %v1690 = vunpack.c.l.b16 %v1667
        %v1691 = vpack.c.b16 %v1684, %v1683
        %v1692 = vpack.c.b16 %v1686, %v1685
        %v1693 = vpack.c.b16 %v1688, %v1687
        %v1694 = vpack.c.b16 %v1690, %v1689
        %vm1699 = vcmask 523264
        %v1701 = vsel %vm1699, %v1659, 0
        %1703 = vmatprep.subr.bf16.mxu0 0
        %1704 = vmatpush1.bf16.msra.mxu0 0
        %1705 = vmatprep.subr.bf16.mxu0 0
        %1706 = vmatpush1.bf16.msra.mxu0 0
        %1707 = vmatprep.subr.bf16.mxu0 0
        %1708 = vmatpush1.bf16.msra.mxu0 0
        %1709 = vmatprep.subr.bf16.mxu0 0
        %1710 = vmatpush1.bf16.msra.mxu0 0
        %1711 = vmatprep.subr.bf16.mxu0 0
        %1712 = vmatpush1.bf16.msra.mxu0 %v1694
        %1713 = vmatprep.subr.bf16.mxu0 0
        %1714 = vmatpush1.bf16.msra.mxu0 %v1693
        %1715 = vmatprep.subr.bf16.mxu0 0
        %1716 = vmatpush1.bf16.msra.mxu0 %v1692
        %1717 = vmatprep.subr.bf16.mxu0 0
        %1718 = vmatpush1.bf16.msra.mxu0 %v1691
        %1719 = vmatprep.subr.bf16.mxu0 0
        %1720 = vmatpush2.bf16.msra.mxu0 0
        %1721 = vmatprep.subr.bf16.mxu0 0
        %1722 = vmatpush2.bf16.msra.mxu0 0
        %1723 = vmatprep.subr.bf16.mxu0 0
        %1724 = vmatpush2.bf16.msra.mxu0 0
        %1725 = vmatprep.subr.bf16.mxu0 0
        %1726 = vmatpush2.bf16.msra.mxu0 0
        %1727 = vmatprep.subr.bf16.mxu0 0
        %1728 = vmatpush2.bf16.msra.mxu0 0
        %1729 = vmatprep.subr.bf16.mxu0 0
        %1730 = vmatpush2.bf16.msra.mxu0 0
        %1731 = vmatprep.subr.bf16.mxu0 0
        %1732 = vmatpush2.bf16.msra.mxu0 0
        %1733 = vmatprep.subr.bf16.mxu0 0
        %1734 = vmatpush2.bf16.msra.mxu0 0
        %1735 = vmatprep.mubr.bf16.mxu0 0
        %1736 = vmatmul.mubr.bf16.gmra.mxu0 %v1701
        %v1737 = vpop.f32.mrf.mxu0
        %v1738 = vadd.f32 %v1673, %v1737
        %v1739 = vpop.f32.mrf.mxu0
        %v1740 = vpop.f32.mrf.mxu0
        %v1741 = vpop.f32.mrf.mxu0
        %1742 = vdwg.mxu0
        %v1743 = vadd.f32 %v1554, %v1738
        %1744 = vst.msk [vmem:[%s726] sm:$0xff] %vm742, %v1743
        %s1745 = sand.u32 %s476, 1
        %s1746 = scalar_lea.sflag [#allocation4], %s1745
        %s1747 = sand.u32 %s476, 1
        %s1748 = smul.addr %s1747, 8
        %s1749 = scalar_lea.vmem [#allocation11], %s1748
        // Predicated region
        $region117: #{tpu_custom_call.1} parent=95 // pred_check
          %p1750 = pneg %p486
        $region118: #{tpu_custom_call.1} parent=95 // pred_check_branch
          %1752 = sbr.rel (%p1750) target = $region120
        $region119: #{tpu_custom_call.1} parent=95 // pred_region
          %s1754 = ssub.s32 128, 128
          %1755 = vsyncadd %s1746, %s1754
          %s1756 = smul.addr %s42, 2
          %s1757 = sadd.s32 %s43, %s1756
          %s1758 = smul.addr %s1757, 128
          %s1759 = scalar_lea.hbm %s19, %s1758
          %s1761 = sshll.u32 %s1749, 4
          %s1762 = int_to_ptr.vmem [resolvable:$true] %s1761
          %1764 = dma.vmem_to_hbm [thread:$0]  %s1762, 128, %s1759, %s1746
        $region120: #{tpu_custom_call.1} parent=95 // pred_fallthru
          _
      $region96: #{tpu_custom_call.1} parent=5 // pred_fallthru
        _
      %p1765 = scmp.le.s32.totalorder 2, %s33
      // Predicated region
      $region121: #{tpu_custom_call.1} parent=5 // pred_check
        %p1766 = pneg %p1765
      $region122: #{tpu_custom_call.1} parent=5 // pred_check_branch
        %1768 = sbr.rel (%p1766) target = $region124
      $region123: #{tpu_custom_call.1} parent=5 // pred_region
        %s1769 = ssub.s32 %s33, 2
        // Predicated region
        $region125: #{tpu_custom_call.1} parent=123 // pred_check
          %p1770 = pneg %p492
        $region126: #{tpu_custom_call.1} parent=123 // pred_check_branch
          %1772 = sbr.rel (%p1770) target = $region128
        $region127: #{tpu_custom_call.1} parent=123 // pred_region
          %s1773 = sand.u32 %s477, 1
          %s1774 = scalar_lea.sflag [#allocation4], %s1773
          %s1775 = sand.u32 %s477, 1
          %s1776 = smul.addr %s1775, 8
          %s1777 = scalar_lea.vmem [#allocation11], %s1776
          %1778 = dma.done %s1774, 128
        $region128: #{tpu_custom_call.1} parent=123 // pred_fallthru
          _
      $region124: #{tpu_custom_call.1} parent=5 // pred_fallthru
        _
    $region6: #{tpu_custom_call.1} parent=1 // loop_footer
      %s37 = sadd.s32 1, %s33
    $region7: #{tpu_custom_call.1} parent=1 // loop_footer_branch
      %32 = sbr.rel target = $region3
    $region8: #{tpu_custom_call.1} parent=1 // loop_exit
      _
    %1779 = vsyncpa [#allocation3], 1
    %s1780 = scalar_lea.sflag [#allocation3], 1
    %1781 = vsyncpa %s1780, 1
    %1782 = vsyncpa [#allocation6], 1
    %1783 = vsyncpa [#allocation9], 1
    %1784 = vsyncpa [#allocation4], 1
    %s1785 = scalar_lea.sflag [#allocation4], 1
    %1786 = vsyncpa %s1785, 1

</llo_original>
